<compile_context>
chip_gen: v6e
topology: v6e:2x2x1
jax: 0.10.0
libtpu: 0.0.40
codegen_flags: <defaults>
</compile_context>

<pallas_src>
import numpy as np
import jax
import jax.numpy as jnp
from jax import lax
from jax.experimental import pallas as pl
from jax.experimental.pallas import tpu as pltpu  # noqa: F401  (kept for TPU-specific tuning hooks)

BN_EPS = 1e-5  # PyTorch BatchNorm2d default eps


# ---------------------------------------------------------------------------
# The fused decoder kernel (single invocation, everything resident in VMEM)
# ---------------------------------------------------------------------------
def _decoder_kernel(x_ref, p0_ref,
                    w1_ref, bias1_ref, mc1_ref, g1_ref, be1_ref,
                    w2_ref, bias2_ref, mc2_ref, g2_ref, be2_ref,
                    w3_ref, bias3_ref,
                    out_ref):
    f32 = jnp.float32
    bf16 = jnp.bfloat16
    p0 = p0_ref[...]                                    # (R0, R0) bf16 0/1 "height+1" shift

    def down0(xb):
        # xb: (R0, W*C) bf16, rows = batch-major / height-minor blocks of H0.
        # Returns the row at height+1 (zero at the bottom edge). 0/1 matmul -> exact in bf16.
        return jnp.dot(p0, xb, preferred_element_type=f32).astype(bf16)

    def convT(xb, xdb, w_ref, bias_ref):
        # One fused MXU matmul per layer: [x | x_down] @ [[A, B0], [0, B1]] + [bias | bias].
        # First half of the output columns = even output-height rows, second half = odd rows.
        lhs = jnp.concatenate([xb, xdb], axis=1)                         # (R, 2*W*Cin) bf16
        return jnp.dot(lhs, w_ref[...], preferred_element_type=f32) + bias_ref[...]

    def bn_relu(ye, yo, mc_ref, g_ref, be_ref):
        # Training-mode BatchNorm (batch statistics) + ReLU over both halves jointly.
        # Row sums first (sublane reduce), then one small (2, WC) @ (WC, WC) matmul
        # broadcasts the per-channel sums back to every (width, channel) lane.
        s1 = jnp.sum(ye, axis=0, keepdims=True) + jnp.sum(yo, axis=0, keepdims=True)
        s2 = (jnp.sum(ye * ye, axis=0, keepdims=True)
              + jnp.sum(yo * yo, axis=0, keepdims=True))
        stats = jnp.concatenate([s1, s2], axis=0)                        # (2, WC) f32
        bc = jnp.dot(stats, mc_ref[...], preferred_element_type=f32)     # mc folds in 1/count
        mean, ex2 = bc[0:1, :], bc[1:2, :]
        inv = lax.rsqrt(ex2 - mean * mean + BN_EPS)
        scale = inv * g_ref[...]
        shift = be_ref[...] - mean * scale
        yen = jnp.maximum(ye * scale + shift, 0.0).astype(bf16)
        yon = jnp.maximum(yo * scale + shift, 0.0).astype(bf16)
        return yen, yon

    # ---- layer 1: ConvT(64 -> 32) + BN + ReLU ----
    x1 = x_ref[...]                                      # (R0, W0*64) bf16
    y1 = convT(x1, down0(x1), w1_ref, bias1_ref)         # (R0, 2 * 2W0*32) f32
    n1 = y1.shape[1] // 2
    ye1, yo1 = bn_relu(y1[:, :n1], y1[:, n1:], mc1_ref, g1_ref, be1_ref)

    # ---- layer 2: ConvT(32 -> 16) + BN + ReLU ----
    x2 = jnp.concatenate([ye1, yo1], axis=0)             # rows: [even heights | odd heights]
    xd2 = jnp.concatenate([yo1, down0(ye1)], axis=0)     # height+1 rows, same ordering
    y2 = convT(x2, xd2, w2_ref, bias2_ref)
    n2 = y2.shape[1] // 2
    ye2, yo2 = bn_relu(y2[:, :n2], y2[:, n2:], mc2_ref, g2_ref, be2_ref)

    # ---- layer 3: ConvT(16 -> 1) + sigmoid; raw [even | odd] layout (un-permuted on host) ----
    r0 = ye1.shape[0]
    x3 = jnp.concatenate([ye2, yo2], axis=0)
    xd3 = jnp.concatenate(
        [yo2, jnp.concatenate([ye2[r0:], down0(ye2[:r0])], axis=0)], axis=0)
    y3 = convT(x3, xd3, w3_ref, bias3_ref)               # (R2, 2 * 8*W0) f32
    out_ref[...] = jax.nn.sigmoid(y3)


# ---------------------------------------------------------------------------
# Host-side (one-time) weight preprocessing
# ---------------------------------------------------------------------------
def preprocess_params(params, N=2, H0=4, W0=4):
    """Fold conv weights into one fused banded matrix per layer + small helper arrays."""
    f32 = np.float32

    def band(w, b, w_in):
        # w: (3, 3, Cin, Cout), b: (1, Cout) -> A, B0, B1 (w_in*Cin, 2*w_in*Cout), bias row.
        w = np.asarray(w, f32)
        b = np.asarray(b, f32).reshape(-1)
        cin, cout = w.shape[2], w.shape[3]
        wout = 2 * w_in
        A = np.zeros((w_in * cin, wout * cout), f32)
        B0 = np.zeros_like(A)
        B1 = np.zeros_like(A)

        def put(M, j_src, q, kh, kw):
            if 0 <= j_src < w_in:
                M[j_src * cin:(j_src + 1) * cin, q * cout:(q + 1) * cout] += w[kh, kw]

        # Parity decomposition of ConvTranspose2d(3, stride=2, padding=1, output_padding=1):
        #   y[2i,  2j  ] = x[i,  j  ] @ W[1,1]
        #   y[2i,  2j+1] = x[i,  j+1] @ W[1,0] + x[i,j] @ W[1,2]
        #   y[2i+1,2j  ] = x[i+1,j  ] @ W[0,1] + x[i,j] @ W[2,1]
        #   y[2i+1,2j+1] = x[i+1,j+1] @ W[0,0] + x[i+1,j] @ W[0,2] + x[i,j+1] @ W[2,0] + x[i,j] @ W[2,2]
        for j in range(w_in):
            put(A,  j,     2 * j,     1, 1)
            put(A,  j,     2 * j + 1, 1, 2)
            put(A,  j + 1, 2 * j + 1, 1, 0)
            put(B0, j,     2 * j,     2, 1)
            put(B0, j,     2 * j + 1, 2, 2)
            put(B0, j + 1, 2 * j + 1, 2, 0)
            put(B1, j,     2 * j,     0, 1)
            put(B1, j,     2 * j + 1, 0, 2)
            put(B1, j + 1, 2 * j + 1, 0, 0)
        bias = np.tile(b, wout).reshape(1, wout * cout)
        return A, B0, B1, bias

    def fuse(w, b, w_in):
        # Fused weight: [x | x_down] @ [[A, B0], [0, B1]];  bias doubled for [even | odd].
        A, B0, B1, bias = band(w, b, w_in)
        Wf = np.concatenate([np.concatenate([A, B0], axis=1),
                             np.concatenate([np.zeros_like(A), B1], axis=1)], axis=0)
        return Wf, np.concatenate([bias, bias], axis=1)

    def chan_mean(w_sp, c, count):
        # (w_sp*c, w_sp*c): sums columns of the same channel, broadcasts back, scaled 1/count.
        return np.kron(np.ones((w_sp, w_sp), f32), np.eye(c, dtype=f32)) / count

    W1, bias1 = fuse(params["w1"], params["b1"], W0)
    W2, bias2 = fuse(params["w2"], params["b2"], 2 * W0)
    W3, bias3 = fuse(params["w3"], params["b3"], 4 * W0)

    # Height+1 shift within each batch's H0-row block (zero at the bottom edge); exact 0/1.
    R0 = N * H0
    P0 = np.zeros((R0, R0), f32)
    for t in range(R0):
        if (t % H0) != H0 - 1:
            P0[t, t + 1] = 1.0

    g1 = np.asarray(params["g1"], f32).reshape(-1)
    be1 = np.asarray(params["be1"], f32).reshape(-1)
    g2 = np.asarray(params["g2"], f32).reshape(-1)
    be2 = np.asarray(params["be2"], f32).reshape(-1)
    c1, c2 = g1.shape[0], g2.shape[0]
    w1_out, w2_out = 2 * W0, 4 * W0
    mc1 = chan_mean(w1_out, c1, N * (2 * H0) * w1_out)
    mc2 = chan_mean(w2_out, c2, N * (4 * H0) * w2_out)
    g1_bc = np.tile(g1, w1_out).reshape(1, -1)
    be1_bc = np.tile(be1, w1_out).reshape(1, -1)
    g2_bc = np.tile(g2, w2_out).reshape(1, -1)
    be2_bc = np.tile(be2, w2_out).reshape(1, -1)

    # Row ordering of the kernel output (parity-nested heights) -> NCHW-order gather indices.
    order = [(n, i) for n in range(N) for i in range(H0)]
    order = [(n, 2 * h) for n, h in order] + [(n, 2 * h + 1) for n, h in order]   # after layer 1
    order = [(n, 2 * h) for n, h in order] + [(n, 2 * h + 1) for n, h in order]   # after layer 2
    pos = {nh: t for t, nh in enumerate(order)}
    Hf = 8 * H0
    row_index = np.array([2 * pos[(n, hf // 2)] + (hf % 2)
                          for n in range(N) for hf in range(Hf)], np.int32)

    bfl = jnp.bfloat16
    j32 = lambda a: jnp.asarray(a, jnp.float32)
    return dict(
        p0=jnp.asarray(P0, bfl),
        w1=jnp.asarray(W1, bfl), bias1=j32(bias1), mc1=j32(mc1), g1=j32(g1_bc), be1=j32(be1_bc),
        w2=jnp.asarray(W2, bfl), bias2=j32(bias2), mc2=j32(mc2), g2=j32(g2_bc), be2=j32(be2_bc),
        w3=jnp.asarray(W3, bfl), bias3=j32(bias3),
        row_index=jnp.asarray(row_index),
    )


# ---------------------------------------------------------------------------
# Forward wrapper
# ---------------------------------------------------------------------------
def decoder_forward(x_nchw, prep):
    """x_nchw: (N, 64, H0, W0) -> (N, 1, 8*H0, 8*W0)."""
    N, C0, H0, W0 = x_nchw.shape
    # rows = n*H0 + i, lanes = j*C0 + c (width-major, channel-minor); bf16 for the MXU.
    x2d = jnp.transpose(x_nchw, (0, 2, 3, 1)).reshape(N * H0, W0 * C0).astype(jnp.bfloat16)

    Hf, Wf = 8 * H0, 8 * W0
    R2 = 4 * N * H0                      # kernel-output rows (layer-3 input rows)
    out2d = pl.pallas_call(
        _decoder_kernel,
        out_shape=jax.ShapeDtypeStruct((R2, 2 * Wf), jnp.float32),
    )(x2d, prep["p0"],
      prep["w1"], prep["bias1"], prep["mc1"], prep["g1"], prep["be1"],
      prep["w2"], prep["bias2"], prep["mc2"], prep["g2"], prep["be2"],
      prep["w3"], prep["bias3"])

    # Tiny host-side un-permutation of the raw [even | odd] row layout back to NCHW.
    flat = out2d.reshape(2 * R2, Wf)
    final = flat[prep["row_index"]]
    return final.reshape(N, 1, Hf, Wf)


# ---------------------------------------------------------------------------
# Deterministic parameter init (shapes from Decoder.__init__)
# ---------------------------------------------------------------------------
def init_params(key):
    def convT_init(k, cin, cout):
        kw, kb = jax.random.split(k)
        bound = 1.0 / np.sqrt(cin * 9)
        w = jax.random.uniform(kw, (3, 3, cin, cout), jnp.float32, -bound, bound)
        b = jax.random.uniform(kb, (1, cout), jnp.float32, -bound, bound)
        return w, b

    k1, k2, k3 = jax.random.split(key, 3)
    w1, b1 = convT_init(k1, 64, 32)
    w2, b2 = convT_init(k2, 32, 16)
    w3, b3 = convT_init(k3, 16, 1)
    return dict(
        w1=w1, b1=b1, w2=w2, b2=b2, w3=w3, b3=b3,
        g1=jnp.ones((1, 32), jnp.float32), be1=jnp.zeros((1, 32), jnp.float32),
        g2=jnp.ones((1, 16), jnp.float32), be2=jnp.zeros((1, 16), jnp.float32),
    )


# ---------------------------------------------------------------------------
# Pure-JAX reference (numerical sanity check)
# ---------------------------------------------------------------------------
def _ref_convT(x_nchw, w_kkio, b):
    w_pt = jnp.transpose(w_kkio, (2, 3, 0, 1))                       # (Cin, Cout, 3, 3)
    w_conv = jnp.transpose(jnp.flip(w_pt, (2, 3)), (1, 0, 2, 3))     # (Cout, Cin, 3, 3)
    y = lax.conv_general_dilated(
        x_nchw, w_conv, window_strides=(1, 1), padding=((1, 2), (1, 2)),
        lhs_dilation=(2, 2), dimension_numbers=("NCHW", "OIHW", "NCHW"),
        precision=lax.Precision.HIGHEST)
    return y + b.reshape(1, -1, 1, 1)


def _ref_bn_relu(x):
    mean = jnp.mean(x, axis=(0, 2, 3), keepdims=True)
    var = jnp.mean((x - mean) ** 2, axis=(0, 2, 3), keepdims=True)
    return jnp.maximum((x - mean) / jnp.sqrt(var + BN_EPS), 0.0)


def ref_forward(x_nchw, p):
    x = _ref_bn_relu(_ref_convT(x_nchw, p["w1"], p["b1"]))
    x = _ref_bn_relu(_ref_convT(x, p["w2"], p["b2"]))
    return jax.nn.sigmoid(_ref_convT(x, p["w3"], p["b3"]))


if __name__ == "__main__":
    key = jax.random.PRNGKey(0)
    kx, kp = jax.random.split(key)
    # latent consistent with the module: N=2, C=64, 4x4 spatial -> output (2, 1, 32, 32)
    x = jax.random.normal(kx, (2, 64, 4, 4), jnp.float32)
    params = init_params(kp)

    prep = preprocess_params(params, N=2, H0=4, W0=4)   # one-time host-side weight folding
    fwd = jax.jit(decoder_forward)

    out = jax.block_until_ready(fwd(x, prep))
    assert out.shape == (2, 1, 32, 32), out.shape

    ref = jax.block_until_ready(ref_forward(x, params))
    # Matmul operands are bf16 (f32 accumulation); structural bugs would produce errors
    # orders of magnitude larger than this tolerance.
    np.testing.assert_allclose(np.asarray(out), np.asarray(ref), rtol=2e-2, atol=2e-2)

    print("KERNEL_OK")
</pallas_src>

<mosaic_0001>
module attributes {stable_mosaic.version = 11 : i64} {
  func.func @_decoder_kernel(%arg0: memref<8x256xbf16, #tpu.memory_space<vmem>>, %arg1: memref<8x8xbf16, #tpu.memory_space<vmem>>, %arg2: memref<512x512xbf16, #tpu.memory_space<vmem>>, %arg3: memref<1x512xf32, #tpu.memory_space<vmem>>, %arg4: memref<256x256xf32, #tpu.memory_space<vmem>>, %arg5: memref<1x256xf32, #tpu.memory_space<vmem>>, %arg6: memref<1x256xf32, #tpu.memory_space<vmem>>, %arg7: memref<512x512xbf16, #tpu.memory_space<vmem>>, %arg8: memref<1x512xf32, #tpu.memory_space<vmem>>, %arg9: memref<256x256xf32, #tpu.memory_space<vmem>>, %arg10: memref<1x256xf32, #tpu.memory_space<vmem>>, %arg11: memref<1x256xf32, #tpu.memory_space<vmem>>, %arg12: memref<512x64xbf16, #tpu.memory_space<vmem>>, %arg13: memref<1x64xf32, #tpu.memory_space<vmem>>, %arg14: memref<32x64xf32, #tpu.memory_space<vmem>>) attributes {dimension_semantics = [], scalar_prefetch = 0 : i64, scratch_operands = 0 : i64, tpu.core_type = #tpu.core_type<tc>} {
    %c0 = arith.constant 0 : index
    %c0_0 = arith.constant 0 : index
    %0 = vector.load %arg1[%c0, %c0_0] : memref<8x8xbf16, #tpu.memory_space<vmem>>, vector<8x8xbf16>
    %c0_1 = arith.constant 0 : index
    %c0_2 = arith.constant 0 : index
    %1 = vector.load %arg0[%c0_1, %c0_2] : memref<8x256xbf16, #tpu.memory_space<vmem>>, vector<8x256xbf16>
    %cst = arith.constant dense<0.000000e+00> : vector<8x256xf32>
    %2 = tpu.matmul %0, %1, %cst {dimension_numbers = #tpu.dot_dimension_numbers<[1], [0], [0], [1], [0, 0, 1, 1], [], []>} : vector<8x8xbf16>, vector<8x256xbf16>, vector<8x256xf32> -> vector<8x256xf32>
    %3 = arith.truncf %2 : vector<8x256xf32> to vector<8x256xbf16>
    %4 = tpu.concatenate %1, %3 in 1 : vector<8x256xbf16>, vector<8x256xbf16> -> vector<8x512xbf16>
    %c0_3 = arith.constant 0 : index
    %c0_4 = arith.constant 0 : index
    %5 = vector.load %arg2[%c0_3, %c0_4] : memref<512x512xbf16, #tpu.memory_space<vmem>>, vector<512x512xbf16>
    %cst_5 = arith.constant dense<0.000000e+00> : vector<8x512xf32>
    %6 = tpu.matmul %4, %5, %cst_5 {dimension_numbers = #tpu.dot_dimension_numbers<[1], [0], [0], [1], [0, 0, 1, 1], [], []>} : vector<8x512xbf16>, vector<512x512xbf16>, vector<8x512xf32> -> vector<8x512xf32>
    %c0_6 = arith.constant 0 : index
    %c0_7 = arith.constant 0 : index
    %7 = vector.load %arg3[%c0_6, %c0_7] : memref<1x512xf32, #tpu.memory_space<vmem>>, vector<1x512xf32>
    %8 = vector.broadcast %7 : vector<1x512xf32> to vector<8x512xf32>
    %9 = arith.addf %6, %8 : vector<8x512xf32>
    %10 = vector.extract_strided_slice %9 {offsets = [0, 0], sizes = [8, 256], strides = [1, 1]} : vector<8x512xf32> to vector<8x256xf32>
    %11 = vector.extract_strided_slice %9 {offsets = [0, 256], sizes = [8, 256], strides = [1, 1]} : vector<8x512xf32> to vector<8x256xf32>
    %cst_8 = arith.constant dense<0.000000e+00> : vector<256xf32>
    %12 = vector.multi_reduction <add>, %10, %cst_8 [0] : vector<8x256xf32> to vector<256xf32>
    %13 = vector.shape_cast %12 : vector<256xf32> to vector<1x256xf32>
    %cst_9 = arith.constant dense<0.000000e+00> : vector<256xf32>
    %14 = vector.multi_reduction <add>, %11, %cst_9 [0] : vector<8x256xf32> to vector<256xf32>
    %15 = vector.shape_cast %14 : vector<256xf32> to vector<1x256xf32>
    %16 = arith.addf %13, %15 : vector<1x256xf32>
    %17 = arith.mulf %10, %10 : vector<8x256xf32>
    %cst_10 = arith.constant dense<0.000000e+00> : vector<256xf32>
    %18 = vector.multi_reduction <add>, %17, %cst_10 [0] : vector<8x256xf32> to vector<256xf32>
    %19 = vector.shape_cast %18 : vector<256xf32> to vector<1x256xf32>
    %20 = arith.mulf %11, %11 : vector<8x256xf32>
    %cst_11 = arith.constant dense<0.000000e+00> : vector<256xf32>
    %21 = vector.multi_reduction <add>, %20, %cst_11 [0] : vector<8x256xf32> to vector<256xf32>
    %22 = vector.shape_cast %21 : vector<256xf32> to vector<1x256xf32>
    %23 = arith.addf %19, %22 : vector<1x256xf32>
    %24 = tpu.concatenate %16, %23 in 0 : vector<1x256xf32>, vector<1x256xf32> -> vector<2x256xf32>
    %c0_12 = arith.constant 0 : index
    %c0_13 = arith.constant 0 : index
    %25 = vector.load %arg4[%c0_12, %c0_13] : memref<256x256xf32, #tpu.memory_space<vmem>>, vector<256x256xf32>
    %cst_14 = arith.constant dense<0.000000e+00> : vector<2x256xf32>
    %26 = tpu.matmul %24, %25, %cst_14 {dimension_numbers = #tpu.dot_dimension_numbers<[1], [0], [0], [1], [0, 0, 1, 1], [], []>} : vector<2x256xf32>, vector<256x256xf32>, vector<2x256xf32> -> vector<2x256xf32>
    %27 = vector.extract_strided_slice %26 {offsets = [0, 0], sizes = [1, 256], strides = [1, 1]} : vector<2x256xf32> to vector<1x256xf32>
    %28 = vector.extract_strided_slice %26 {offsets = [1, 0], sizes = [1, 256], strides = [1, 1]} : vector<2x256xf32> to vector<1x256xf32>
    %29 = arith.mulf %27, %27 : vector<1x256xf32>
    %30 = arith.subf %28, %29 : vector<1x256xf32>
    %cst_15 = arith.constant 9.99999974E-6 : f32
    %31 = vector.broadcast %cst_15 : f32 to vector<1x256xf32>
    %32 = arith.addf %30, %31 : vector<1x256xf32>
    %33 = math.rsqrt %32 : vector<1x256xf32>
    %c0_16 = arith.constant 0 : index
    %c0_17 = arith.constant 0 : index
    %34 = vector.load %arg5[%c0_16, %c0_17] : memref<1x256xf32, #tpu.memory_space<vmem>>, vector<1x256xf32>
    %35 = arith.mulf %33, %34 : vector<1x256xf32>
    %c0_18 = arith.constant 0 : index
    %c0_19 = arith.constant 0 : index
    %36 = vector.load %arg6[%c0_18, %c0_19] : memref<1x256xf32, #tpu.memory_space<vmem>>, vector<1x256xf32>
    %37 = arith.mulf %27, %35 : vector<1x256xf32>
    %38 = arith.subf %36, %37 : vector<1x256xf32>
    %39 = vector.broadcast %35 : vector<1x256xf32> to vector<8x256xf32>
    %40 = arith.mulf %10, %39 : vector<8x256xf32>
    %41 = vector.broadcast %38 : vector<1x256xf32> to vector<8x256xf32>
    %42 = arith.addf %40, %41 : vector<8x256xf32>
    %cst_20 = arith.constant 0.000000e+00 : f32
    %43 = vector.broadcast %cst_20 : f32 to vector<8x256xf32>
    %44 = arith.maximumf %42, %43 : vector<8x256xf32>
    %45 = arith.truncf %44 : vector<8x256xf32> to vector<8x256xbf16>
    %46 = vector.broadcast %35 : vector<1x256xf32> to vector<8x256xf32>
    %47 = arith.mulf %11, %46 : vector<8x256xf32>
    %48 = vector.broadcast %38 : vector<1x256xf32> to vector<8x256xf32>
    %49 = arith.addf %47, %48 : vector<8x256xf32>
    %cst_21 = arith.constant 0.000000e+00 : f32
    %50 = vector.broadcast %cst_21 : f32 to vector<8x256xf32>
    %51 = arith.maximumf %49, %50 : vector<8x256xf32>
    %52 = arith.truncf %51 : vector<8x256xf32> to vector<8x256xbf16>
    %53 = tpu.concatenate %45, %52 in 0 : vector<8x256xbf16>, vector<8x256xbf16> -> vector<16x256xbf16>
    %cst_22 = arith.constant dense<0.000000e+00> : vector<8x256xf32>
    %54 = tpu.matmul %0, %45, %cst_22 {dimension_numbers = #tpu.dot_dimension_numbers<[1], [0], [0], [1], [0, 0, 1, 1], [], []>} : vector<8x8xbf16>, vector<8x256xbf16>, vector<8x256xf32> -> vector<8x256xf32>
    %55 = arith.truncf %54 : vector<8x256xf32> to vector<8x256xbf16>
    %56 = tpu.concatenate %52, %55 in 0 : vector<8x256xbf16>, vector<8x256xbf16> -> vector<16x256xbf16>
    %57 = tpu.concatenate %53, %56 in 1 : vector<16x256xbf16>, vector<16x256xbf16> -> vector<16x512xbf16>
    %c0_23 = arith.constant 0 : index
    %c0_24 = arith.constant 0 : index
    %58 = vector.load %arg7[%c0_23, %c0_24] : memref<512x512xbf16, #tpu.memory_space<vmem>>, vector<512x512xbf16>
    %cst_25 = arith.constant dense<0.000000e+00> : vector<16x512xf32>
    %59 = tpu.matmul %57, %58, %cst_25 {dimension_numbers = #tpu.dot_dimension_numbers<[1], [0], [0], [1], [0, 0, 1, 1], [], []>} : vector<16x512xbf16>, vector<512x512xbf16>, vector<16x512xf32> -> vector<16x512xf32>
    %c0_26 = arith.constant 0 : index
    %c0_27 = arith.constant 0 : index
    %60 = vector.load %arg8[%c0_26, %c0_27] : memref<1x512xf32, #tpu.memory_space<vmem>>, vector<1x512xf32>
    %61 = vector.broadcast %60 : vector<1x512xf32> to vector<16x512xf32>
    %62 = arith.addf %59, %61 : vector<16x512xf32>
    %63 = vector.extract_strided_slice %62 {offsets = [0, 0], sizes = [16, 256], strides = [1, 1]} : vector<16x512xf32> to vector<16x256xf32>
    %64 = vector.extract_strided_slice %62 {offsets = [0, 256], sizes = [16, 256], strides = [1, 1]} : vector<16x512xf32> to vector<16x256xf32>
    %cst_28 = arith.constant dense<0.000000e+00> : vector<256xf32>
    %65 = vector.multi_reduction <add>, %63, %cst_28 [0] : vector<16x256xf32> to vector<256xf32>
    %66 = vector.shape_cast %65 : vector<256xf32> to vector<1x256xf32>
    %cst_29 = arith.constant dense<0.000000e+00> : vector<256xf32>
    %67 = vector.multi_reduction <add>, %64, %cst_29 [0] : vector<16x256xf32> to vector<256xf32>
    %68 = vector.shape_cast %67 : vector<256xf32> to vector<1x256xf32>
    %69 = arith.addf %66, %68 : vector<1x256xf32>
    %70 = arith.mulf %63, %63 : vector<16x256xf32>
    %cst_30 = arith.constant dense<0.000000e+00> : vector<256xf32>
    %71 = vector.multi_reduction <add>, %70, %cst_30 [0] : vector<16x256xf32> to vector<256xf32>
    %72 = vector.shape_cast %71 : vector<256xf32> to vector<1x256xf32>
    %73 = arith.mulf %64, %64 : vector<16x256xf32>
    %cst_31 = arith.constant dense<0.000000e+00> : vector<256xf32>
    %74 = vector.multi_reduction <add>, %73, %cst_31 [0] : vector<16x256xf32> to vector<256xf32>
    %75 = vector.shape_cast %74 : vector<256xf32> to vector<1x256xf32>
    %76 = arith.addf %72, %75 : vector<1x256xf32>
    %77 = tpu.concatenate %69, %76 in 0 : vector<1x256xf32>, vector<1x256xf32> -> vector<2x256xf32>
    %c0_32 = arith.constant 0 : index
    %c0_33 = arith.constant 0 : index
    %78 = vector.load %arg9[%c0_32, %c0_33] : memref<256x256xf32, #tpu.memory_space<vmem>>, vector<256x256xf32>
    %cst_34 = arith.constant dense<0.000000e+00> : vector<2x256xf32>
    %79 = tpu.matmul %77, %78, %cst_34 {dimension_numbers = #tpu.dot_dimension_numbers<[1], [0], [0], [1], [0, 0, 1, 1], [], []>} : vector<2x256xf32>, vector<256x256xf32>, vector<2x256xf32> -> vector<2x256xf32>
    %80 = vector.extract_strided_slice %79 {offsets = [0, 0], sizes = [1, 256], strides = [1, 1]} : vector<2x256xf32> to vector<1x256xf32>
    %81 = vector.extract_strided_slice %79 {offsets = [1, 0], sizes = [1, 256], strides = [1, 1]} : vector<2x256xf32> to vector<1x256xf32>
    %82 = arith.mulf %80, %80 : vector<1x256xf32>
    %83 = arith.subf %81, %82 : vector<1x256xf32>
    %cst_35 = arith.constant 9.99999974E-6 : f32
    %84 = vector.broadcast %cst_35 : f32 to vector<1x256xf32>
    %85 = arith.addf %83, %84 : vector<1x256xf32>
    %86 = math.rsqrt %85 : vector<1x256xf32>
    %c0_36 = arith.constant 0 : index
    %c0_37 = arith.constant 0 : index
    %87 = vector.load %arg10[%c0_36, %c0_37] : memref<1x256xf32, #tpu.memory_space<vmem>>, vector<1x256xf32>
    %88 = arith.mulf %86, %87 : vector<1x256xf32>
    %c0_38 = arith.constant 0 : index
    %c0_39 = arith.constant 0 : index
    %89 = vector.load %arg11[%c0_38, %c0_39] : memref<1x256xf32, #tpu.memory_space<vmem>>, vector<1x256xf32>
    %90 = arith.mulf %80, %88 : vector<1x256xf32>
    %91 = arith.subf %89, %90 : vector<1x256xf32>
    %92 = vector.broadcast %88 : vector<1x256xf32> to vector<16x256xf32>
    %93 = arith.mulf %63, %92 : vector<16x256xf32>
    %94 = vector.broadcast %91 : vector<1x256xf32> to vector<16x256xf32>
    %95 = arith.addf %93, %94 : vector<16x256xf32>
    %cst_40 = arith.constant 0.000000e+00 : f32
    %96 = vector.broadcast %cst_40 : f32 to vector<16x256xf32>
    %97 = arith.maximumf %95, %96 : vector<16x256xf32>
    %98 = arith.truncf %97 : vector<16x256xf32> to vector<16x256xbf16>
    %99 = vector.broadcast %88 : vector<1x256xf32> to vector<16x256xf32>
    %100 = arith.mulf %64, %99 : vector<16x256xf32>
    %101 = vector.broadcast %91 : vector<1x256xf32> to vector<16x256xf32>
    %102 = arith.addf %100, %101 : vector<16x256xf32>
    %cst_41 = arith.constant 0.000000e+00 : f32
    %103 = vector.broadcast %cst_41 : f32 to vector<16x256xf32>
    %104 = arith.maximumf %102, %103 : vector<16x256xf32>
    %105 = arith.truncf %104 : vector<16x256xf32> to vector<16x256xbf16>
    %106 = tpu.concatenate %98, %105 in 0 : vector<16x256xbf16>, vector<16x256xbf16> -> vector<32x256xbf16>
    %107 = vector.extract_strided_slice %98 {offsets = [8, 0], sizes = [8, 256], strides = [1, 1]} : vector<16x256xbf16> to vector<8x256xbf16>
    %108 = vector.extract_strided_slice %98 {offsets = [0, 0], sizes = [8, 256], strides = [1, 1]} : vector<16x256xbf16> to vector<8x256xbf16>
    %cst_42 = arith.constant dense<0.000000e+00> : vector<8x256xf32>
    %109 = tpu.matmul %0, %108, %cst_42 {dimension_numbers = #tpu.dot_dimension_numbers<[1], [0], [0], [1], [0, 0, 1, 1], [], []>} : vector<8x8xbf16>, vector<8x256xbf16>, vector<8x256xf32> -> vector<8x256xf32>
    %110 = arith.truncf %109 : vector<8x256xf32> to vector<8x256xbf16>
    %111 = tpu.concatenate %107, %110 in 0 : vector<8x256xbf16>, vector<8x256xbf16> -> vector<16x256xbf16>
    %112 = tpu.concatenate %105, %111 in 0 : vector<16x256xbf16>, vector<16x256xbf16> -> vector<32x256xbf16>
    %113 = tpu.concatenate %106, %112 in 1 : vector<32x256xbf16>, vector<32x256xbf16> -> vector<32x512xbf16>
    %c0_43 = arith.constant 0 : index
    %c0_44 = arith.constant 0 : index
    %114 = vector.load %arg12[%c0_43, %c0_44] : memref<512x64xbf16, #tpu.memory_space<vmem>>, vector<512x64xbf16>
    %cst_45 = arith.constant dense<0.000000e+00> : vector<32x64xf32>
    %115 = tpu.matmul %113, %114, %cst_45 {dimension_numbers = #tpu.dot_dimension_numbers<[1], [0], [0], [1], [0, 0, 1, 1], [], []>} : vector<32x512xbf16>, vector<512x64xbf16>, vector<32x64xf32> -> vector<32x64xf32>
    %c0_46 = arith.constant 0 : index
    %c0_47 = arith.constant 0 : index
    %116 = vector.load %arg13[%c0_46, %c0_47] : memref<1x64xf32, #tpu.memory_space<vmem>>, vector<1x64xf32>
    %117 = vector.broadcast %116 : vector<1x64xf32> to vector<32x64xf32>
    %118 = arith.addf %115, %117 : vector<32x64xf32>
    %119 = arith.negf %118 : vector<32x64xf32>
    %120 = math.exp %119 : vector<32x64xf32>
    %cst_48 = arith.constant 1.000000e+00 : f32
    %121 = vector.broadcast %cst_48 : f32 to vector<32x64xf32>
    %122 = arith.addf %121, %120 : vector<32x64xf32>
    %123 = arith.divf %121, %122 : vector<32x64xf32>
    %c0_49 = arith.constant 0 : index
    %c0_50 = arith.constant 0 : index
    %124 = vector.load %arg14[%c0_49, %c0_50] : memref<32x64xf32, #tpu.memory_space<vmem>>, vector<32x64xf32>
    tpu.vector_store %arg14[%c0_49, %c0_50], %123 {strides = array<i32>} : memref<32x64xf32, #tpu.memory_space<vmem>>, vector<32x64xf32>,
    return
  }
}

</mosaic_0001>

<llo_original>
// kernel: decoder_forward.1
$region0: #{decoder_forward.1}
  #allocation0 [shape = 'u32[]', space=smem, size = 0x4, offset = 0x4, fixed_abs, tag = 'smem constant byte address 0x4 - core index']
  #allocation1 [shape = 'u32[144,128]{1,0:T(1,128)}', space=vmem, size = 0x12000, scoped, tag = 'internal scratch']
  %s0 = inlined_call_operand.vmem [shape: bf16[8,256], index: 0, kind: input, shape index: {}]
  %s1 = inlined_call_operand.vmem [shape: bf16[8,8], index: 1, kind: input, shape index: {}]
  %s2 = inlined_call_operand.hbm [shape: bf16[512,512], index: 2, kind: input, shape index: {}]
  %s3 = inlined_call_operand.vmem [shape: f32[1,512], index: 3, kind: input, shape index: {}]
  %s4 = inlined_call_operand.hbm [shape: f32[256,256], index: 4, kind: input, shape index: {}]
  %s5 = inlined_call_operand.vmem [shape: f32[1,256], index: 5, kind: input, shape index: {}]
  %s6 = inlined_call_operand.vmem [shape: f32[1,256], index: 6, kind: input, shape index: {}]
  %s7 = inlined_call_operand.hbm [shape: bf16[512,512], index: 7, kind: input, shape index: {}]
  %s8 = inlined_call_operand.vmem [shape: f32[1,512], index: 8, kind: input, shape index: {}]
  %s9 = inlined_call_operand.hbm [shape: f32[256,256], index: 9, kind: input, shape index: {}]
  %s10 = inlined_call_operand.vmem [shape: f32[1,256], index: 10, kind: input, shape index: {}]
  %s11 = inlined_call_operand.vmem [shape: f32[1,256], index: 11, kind: input, shape index: {}]
  %s12 = inlined_call_operand.vmem [shape: bf16[512,64], index: 12, kind: input, shape index: {}]
  %s13 = inlined_call_operand.vmem [shape: f32[1,64], index: 13, kind: input, shape index: {}]
  %s14 = inlined_call_operand.vmem [shape: f32[32,64], index: 14, kind: output, shape index: {}]
  %s15 = sld [smem:[#allocation0]]
  $region82: #{decoder_forward.1} parent=0
    _
  %s17 = ssub.s32 1, %s15
  %s18 = scalar_select 0, %s17, %s15
  $region1: #{decoder_forward.1} parent=0
    #allocation2 [shape = 'u8[524288]{0}', space=vmem, size = 0x80000, scoped, tag = 'input window, operand 2, single buffered']
    #allocation3 [shape = 's32[1]{0}', space=sflag, size = 0x4, scoped, tag = 'scoped memory for decoder_forward.1']
    #allocation4 [shape = 'u8[262144]{0}', space=vmem, size = 0x40000, scoped, tag = 'input window, operand 4, single buffered']
    #allocation5 [shape = 's32[1]{0}', space=sflag, size = 0x4, scoped, tag = 'scoped memory for decoder_forward.1']
    #allocation6 [shape = 'u8[524288]{0}', space=vmem, size = 0x80000, scoped, tag = 'input window, operand 7, single buffered']
    #allocation7 [shape = 'u8[262144]{0}', space=vmem, size = 0x40000, scoped, tag = 'input window, operand 9, single buffered']
    #allocation8 [shape = 's32[1]{0}', space=sflag, size = 0x4, scoped, tag = 'scoped memory for decoder_forward.1']
    %19 = vsyncpa [#allocation3], 0
    %20 = vsyncpa [#allocation5], 0
    %21 = vsyncpa [#allocation8], 0
    // Predicated region
    $region2: #{decoder_forward.1} parent=1 // pred_check
      _
    $region3: #{decoder_forward.1} parent=1 // pred_check_branch
      %23 = sbr.rel (0) target = $region5
    $region4: #{decoder_forward.1} parent=1 // pred_region
      _
    $region5: #{decoder_forward.1} parent=1 // pred_fallthru
      _
    // Predicated region
    $region6: #{decoder_forward.1} parent=1 // pred_check
      _
    $region7: #{decoder_forward.1} parent=1 // pred_check_branch
      %25 = sbr.rel (0) target = $region9
    $region8: #{decoder_forward.1} parent=1 // pred_region
      _
    $region9: #{decoder_forward.1} parent=1 // pred_fallthru
      _
    // Predicated region
    $region10: #{decoder_forward.1} parent=1 // pred_check
      _
    $region11: #{decoder_forward.1} parent=1 // pred_check_branch
      %27 = sbr.rel (0) target = $region13
    $region12: #{decoder_forward.1} parent=1 // pred_region
      %s29 = ssub.s32 16384, 16384
      %30 = vsyncadd [#allocation3], %s29
      %s31 = sshll.u32 [#allocation2], 4
      %s32 = int_to_ptr.vmem [resolvable:$true] %s31
      %37 = dma.hbm_to_vmem [thread:$0]  %s2, 16384, %s32, [#allocation3], 256, 256, 16
    $region13: #{decoder_forward.1} parent=1 // pred_fallthru
      _
    // Predicated region
    $region14: #{decoder_forward.1} parent=1 // pred_check
      _
    $region15: #{decoder_forward.1} parent=1 // pred_check_branch
      %39 = sbr.rel (0) target = $region17
    $region16: #{decoder_forward.1} parent=1 // pred_region
      _
    $region17: #{decoder_forward.1} parent=1 // pred_fallthru
      _
    // Predicated region
    $region18: #{decoder_forward.1} parent=1 // pred_check
      _
    $region19: #{decoder_forward.1} parent=1 // pred_check_branch
      %41 = sbr.rel (0) target = $region21
    $region20: #{decoder_forward.1} parent=1 // pred_region
      %s43 = ssub.s32 8192, 8192
      %44 = vsyncadd [#allocation5], %s43
      %s45 = sshll.u32 [#allocation4], 4
      %s46 = int_to_ptr.vmem [resolvable:$true] %s45
      %51 = dma.hbm_to_vmem [thread:$0]  %s4, 8192, %s46, [#allocation5], 256, 256, 16
    $region21: #{decoder_forward.1} parent=1 // pred_fallthru
      _
    // Predicated region
    $region22: #{decoder_forward.1} parent=1 // pred_check
      _
    $region23: #{decoder_forward.1} parent=1 // pred_check_branch
      %53 = sbr.rel (0) target = $region25
    $region24: #{decoder_forward.1} parent=1 // pred_region
      _
    $region25: #{decoder_forward.1} parent=1 // pred_fallthru
      _
    // Predicated region
    $region26: #{decoder_forward.1} parent=1 // pred_check
      _
    $region27: #{decoder_forward.1} parent=1 // pred_check_branch
      %55 = sbr.rel (0) target = $region29
    $region28: #{decoder_forward.1} parent=1 // pred_region
      _
    $region29: #{decoder_forward.1} parent=1 // pred_fallthru
      _
    // Predicated region
    $region30: #{decoder_forward.1} parent=1 // pred_check
      _
    $region31: #{decoder_forward.1} parent=1 // pred_check_branch
      %57 = sbr.rel (0) target = $region33
    $region32: #{decoder_forward.1} parent=1 // pred_region
      %s59 = ssub.s32 16384, 16384
      %60 = vsyncadd [#allocation5], %s59
      %s61 = sshll.u32 [#allocation6], 4
      %s62 = int_to_ptr.vmem [resolvable:$true] %s61
      %67 = dma.hbm_to_vmem [thread:$0]  %s7, 16384, %s62, [#allocation5], 256, 256, 16
    $region33: #{decoder_forward.1} parent=1 // pred_fallthru
      _
    // Predicated region
    $region34: #{decoder_forward.1} parent=1 // pred_check
      _
    $region35: #{decoder_forward.1} parent=1 // pred_check_branch
      %69 = sbr.rel (0) target = $region37
    $region36: #{decoder_forward.1} parent=1 // pred_region
      _
    $region37: #{decoder_forward.1} parent=1 // pred_fallthru
      _
    // Predicated region
    $region38: #{decoder_forward.1} parent=1 // pred_check
      _
    $region39: #{decoder_forward.1} parent=1 // pred_check_branch
      %71 = sbr.rel (0) target = $region41
    $region40: #{decoder_forward.1} parent=1 // pred_region
      %s73 = ssub.s32 8192, 8192
      %74 = vsyncadd [#allocation8], %s73
      %s75 = sshll.u32 [#allocation7], 4
      %s76 = int_to_ptr.vmem [resolvable:$true] %s75
      %81 = dma.hbm_to_vmem [thread:$0]  %s9, 8192, %s76, [#allocation8], 256, 256, 16
    $region41: #{decoder_forward.1} parent=1 // pred_fallthru
      _
    // Predicated region
    $region42: #{decoder_forward.1} parent=1 // pred_check
      _
    $region43: #{decoder_forward.1} parent=1 // pred_check_branch
      %83 = sbr.rel (0) target = $region45
    $region44: #{decoder_forward.1} parent=1 // pred_region
      _
    $region45: #{decoder_forward.1} parent=1 // pred_fallthru
      _
    // Predicated region
    $region46: #{decoder_forward.1} parent=1 // pred_check
      _
    $region47: #{decoder_forward.1} parent=1 // pred_check_branch
      %85 = sbr.rel (0) target = $region49
    $region48: #{decoder_forward.1} parent=1 // pred_region
      _
    $region49: #{decoder_forward.1} parent=1 // pred_fallthru
      _
    // Predicated region
    $region50: #{decoder_forward.1} parent=1 // pred_check
      _
    $region51: #{decoder_forward.1} parent=1 // pred_check_branch
      %87 = sbr.rel (0) target = $region53
    $region52: #{decoder_forward.1} parent=1 // pred_region
      _
    $region53: #{decoder_forward.1} parent=1 // pred_fallthru
      _
    // Predicated region
    $region54: #{decoder_forward.1} parent=1 // pred_check
      _
    $region55: #{decoder_forward.1} parent=1 // pred_check_branch
      %89 = sbr.rel (0) target = $region57
    $region56: #{decoder_forward.1} parent=1 // pred_region
      _
    $region57: #{decoder_forward.1} parent=1 // pred_fallthru
      _
    // Predicated region
    $region58: #{decoder_forward.1} parent=1 // pred_check
      _
    $region59: #{decoder_forward.1} parent=1 // pred_check_branch
      %91 = sbr.rel (0) target = $region61
    $region60: #{decoder_forward.1} parent=1 // pred_region
      %92 = dma.done [#allocation3], 16384
    $region61: #{decoder_forward.1} parent=1 // pred_fallthru
      _
    // Predicated region
    $region62: #{decoder_forward.1} parent=1 // pred_check
      _
    $region63: #{decoder_forward.1} parent=1 // pred_check_branch
      %94 = sbr.rel (0) target = $region65
    $region64: #{decoder_forward.1} parent=1 // pred_region
      %95 = dma.done [#allocation5], 8192
    $region65: #{decoder_forward.1} parent=1 // pred_fallthru
      _
    // Predicated region
    $region66: #{decoder_forward.1} parent=1 // pred_check
      _
    $region67: #{decoder_forward.1} parent=1 // pred_check_branch
      %97 = sbr.rel (0) target = $region69
    $region68: #{decoder_forward.1} parent=1 // pred_region
      %98 = dma.done [#allocation5], 16384
    $region69: #{decoder_forward.1} parent=1 // pred_fallthru
      _
    // Predicated region
    $region70: #{decoder_forward.1} parent=1 // pred_check
      _
    $region71: #{decoder_forward.1} parent=1 // pred_check_branch
      %100 = sbr.rel (0) target = $region73
    $region72: #{decoder_forward.1} parent=1 // pred_region
      %101 = dma.done [#allocation8], 8192
    $region73: #{decoder_forward.1} parent=1 // pred_fallthru
      _
    %v103 = vld [vmem:[%s1] sm:$0xf]
    %v104 = vld [vmem:[%s0] sm:$0xff]
    %v106 = vunpack.c.l.b16 %v104
    %v107 = vunpack.c.h.b16 %v104
    %v108 = vpack.c.b16 %v106, %v106
    %v109 = vpack.c.b16 %v107, %v107
    %vm110 = vcmask 64512
    %v112 = vsel %vm110, %v103, 0
    %vm114 = vcmask 1043456
    %v116 = vsel %vm114, %v108, 0
    %v119 = vsel %vm114, %v109, 0
    %121 = vmatprep.subr.bf16.mxu0 0
    %122 = vmatpush1.bf16.msra.mxu0 0
    %123 = vmatprep.subr.bf16.mxu0 0
    %124 = vmatpush1.bf16.msra.mxu0 0
    %125 = vmatprep.subr.bf16.mxu0 0
    %126 = vmatpush1.bf16.msra.mxu0 0
    %127 = vmatprep.subr.bf16.mxu0 0
    %128 = vmatpush1.bf16.msra.mxu0 0
    %129 = vmatprep.subr.bf16.mxu0 0
    %130 = vmatpush1.bf16.msra.mxu0 0
    %131 = vmatprep.subr.bf16.mxu0 0
    %132 = vmatpush1.bf16.msra.mxu0 0
    %133 = vmatprep.subr.bf16.mxu0 0
    %134 = vmatpush1.bf16.msra.mxu0 0
    %135 = vmatprep.subr.bf16.mxu0 %v119
    %136 = vmatpush1.bf16.msra.mxu0 %v116
    %137 = vmatprep.subr.bf16.mxu0 0
    %138 = vmatpush2.bf16.msra.mxu0 0
    %139 = vmatprep.subr.bf16.mxu0 0
    %140 = vmatpush2.bf16.msra.mxu0 0
    %141 = vmatprep.subr.bf16.mxu0 0
    %142 = vmatpush2.bf16.msra.mxu0 0
    %143 = vmatprep.subr.bf16.mxu0 0
    %144 = vmatpush2.bf16.msra.mxu0 0
    %145 = vmatprep.subr.bf16.mxu0 0
    %146 = vmatpush2.bf16.msra.mxu0 0
    %147 = vmatprep.subr.bf16.mxu0 0
    %148 = vmatpush2.bf16.msra.mxu0 0
    %149 = vmatprep.subr.bf16.mxu0 0
    %150 = vmatpush2.bf16.msra.mxu0 0
    %151 = vmatprep.subr.bf16.mxu0 0
    %152 = vmatpush2.bf16.msra.mxu0 0
    %153 = vmatprep.mubr.bf16.mxu0 0
    %154 = vmatmul.mubr.bf16.gmra.mxu0 %v112
    %v155 = vpop.f32.mrf.mxu0
    %v156 = vadd.f32 0.0, %v155
    %v157 = vpop.f32.mrf.mxu0
    %v158 = vadd.f32 0.0, %v157
    %v159 = vpop.f32.mrf.mxu0
    %v160 = vpop.f32.mrf.mxu0
    %161 = vdwg.mxu0
    %v162 = vpack.c.bf16 %v156, %v156
    %v163 = vpack.c.bf16 %v158, %v158
    %v166 = vld [vmem:[#allocation2] sm:$0xff]
    %v167 = vld [vmem:[#allocation2 + $0x8] sm:$0xff]
    %v168 = vld [vmem:[#allocation2 + $0x10] sm:$0xff]
    %v169 = vld [vmem:[#allocation2 + $0x18] sm:$0xff]
    %v170 = vld [vmem:[#allocation2 + $0x20] sm:$0xff]
    %v171 = vld [vmem:[#allocation2 + $0x28] sm:$0xff]
    %v172 = vld [vmem:[#allocation2 + $0x30] sm:$0xff]
    %v173 = vld [vmem:[#allocation2 + $0x38] sm:$0xff]
    %v174 = vld [vmem:[#allocation2 + $0x40] sm:$0xff]
    %v175 = vld [vmem:[#allocation2 + $0x48] sm:$0xff]
    %v176 = vld [vmem:[#allocation2 + $0x50] sm:$0xff]
    %v177 = vld [vmem:[#allocation2 + $0x58] sm:$0xff]
    %v178 = vld [vmem:[#allocation2 + $0x60] sm:$0xff]
    %v179 = vld [vmem:[#allocation2 + $0x68] sm:$0xff]
    %v180 = vld [vmem:[#allocation2 + $0x70] sm:$0xff]
    %v181 = vld [vmem:[#allocation2 + $0x78] sm:$0xff]
    %v182 = vld [vmem:[#allocation2 + $0x80] sm:$0xff]
    %v183 = vld [vmem:[#allocation2 + $0x88] sm:$0xff]
    %v184 = vld [vmem:[#allocation2 + $0x90] sm:$0xff]
    %v185 = vld [vmem:[#allocation2 + $0x98] sm:$0xff]
    %v186 = vld [vmem:[#allocation2 + $0xa0] sm:$0xff]
    %v187 = vld [vmem:[#allocation2 + $0xa8] sm:$0xff]
    %v188 = vld [vmem:[#allocation2 + $0xb0] sm:$0xff]
    %v189 = vld [vmem:[#allocation2 + $0xb8] sm:$0xff]
    %v190 = vld [vmem:[#allocation2 + $0xc0] sm:$0xff]
    %v191 = vld [vmem:[#allocation2 + $0xc8] sm:$0xff]
    %v192 = vld [vmem:[#allocation2 + $0xd0] sm:$0xff]
    %v193 = vld [vmem:[#allocation2 + $0xd8] sm:$0xff]
    %v194 = vld [vmem:[#allocation2 + $0xe0] sm:$0xff]
    %v195 = vld [vmem:[#allocation2 + $0xe8] sm:$0xff]
    %v196 = vld [vmem:[#allocation2 + $0xf0] sm:$0xff]
    %v197 = vld [vmem:[#allocation2 + $0xf8] sm:$0xff]
    %v198 = vld [vmem:[#allocation2 + $0x100] sm:$0xff]
    %v199 = vld [vmem:[#allocation2 + $0x108] sm:$0xff]
    %v200 = vld [vmem:[#allocation2 + $0x110] sm:$0xff]
    %v201 = vld [vmem:[#allocation2 + $0x118] sm:$0xff]
    %v202 = vld [vmem:[#allocation2 + $0x120] sm:$0xff]
    %v203 = vld [vmem:[#allocation2 + $0x128] sm:$0xff]
    %v204 = vld [vmem:[#allocation2 + $0x130] sm:$0xff]
    %v205 = vld [vmem:[#allocation2 + $0x138] sm:$0xff]
    %v206 = vld [vmem:[#allocation2 + $0x140] sm:$0xff]
    %v207 = vld [vmem:[#allocation2 + $0x148] sm:$0xff]
    %v208 = vld [vmem:[#allocation2 + $0x150] sm:$0xff]
    %v209 = vld [vmem:[#allocation2 + $0x158] sm:$0xff]
    %v210 = vld [vmem:[#allocation2 + $0x160] sm:$0xff]
    %v211 = vld [vmem:[#allocation2 + $0x168] sm:$0xff]
    %v212 = vld [vmem:[#allocation2 + $0x170] sm:$0xff]
    %v213 = vld [vmem:[#allocation2 + $0x178] sm:$0xff]
    %v214 = vld [vmem:[#allocation2 + $0x180] sm:$0xff]
    %v215 = vld [vmem:[#allocation2 + $0x188] sm:$0xff]
    %v216 = vld [vmem:[#allocation2 + $0x190] sm:$0xff]
    %v217 = vld [vmem:[#allocation2 + $0x198] sm:$0xff]
    %v218 = vld [vmem:[#allocation2 + $0x1a0] sm:$0xff]
    %v219 = vld [vmem:[#allocation2 + $0x1a8] sm:$0xff]
    %v220 = vld [vmem:[#allocation2 + $0x1b0] sm:$0xff]
    %v221 = vld [vmem:[#allocation2 + $0x1b8] sm:$0xff]
    %v222 = vld [vmem:[#allocation2 + $0x1c0] sm:$0xff]
    %v223 = vld [vmem:[#allocation2 + $0x1c8] sm:$0xff]
    %v224 = vld [vmem:[#allocation2 + $0x1d0] sm:$0xff]
    %v225 = vld [vmem:[#allocation2 + $0x1d8] sm:$0xff]
    %v226 = vld [vmem:[#allocation2 + $0x1e0] sm:$0xff]
    %v227 = vld [vmem:[#allocation2 + $0x1e8] sm:$0xff]
    %v228 = vld [vmem:[#allocation2 + $0x1f0] sm:$0xff]
    %v229 = vld [vmem:[#allocation2 + $0x1f8] sm:$0xff]
    %v230 = vld [vmem:[#allocation2 + $0x200] sm:$0xff]
    %v231 = vld [vmem:[#allocation2 + $0x208] sm:$0xff]
    %v232 = vld [vmem:[#allocation2 + $0x210] sm:$0xff]
    %v233 = vld [vmem:[#allocation2 + $0x218] sm:$0xff]
    %v234 = vld [vmem:[#allocation2 + $0x220] sm:$0xff]
    %v235 = vld [vmem:[#allocation2 + $0x228] sm:$0xff]
    %v236 = vld [vmem:[#allocation2 + $0x230] sm:$0xff]
    %v237 = vld [vmem:[#allocation2 + $0x238] sm:$0xff]
    %v238 = vld [vmem:[#allocation2 + $0x240] sm:$0xff]
    %v239 = vld [vmem:[#allocation2 + $0x248] sm:$0xff]
    %v240 = vld [vmem:[#allocation2 + $0x250] sm:$0xff]
    %v241 = vld [vmem:[#allocation2 + $0x258] sm:$0xff]
    %v242 = vld [vmem:[#allocation2 + $0x260] sm:$0xff]
    %v243 = vld [vmem:[#allocation2 + $0x268] sm:$0xff]
    %v244 = vld [vmem:[#allocation2 + $0x270] sm:$0xff]
    %v245 = vld [vmem:[#allocation2 + $0x278] sm:$0xff]
    %v246 = vld [vmem:[#allocation2 + $0x280] sm:$0xff]
    %v247 = vld [vmem:[#allocation2 + $0x288] sm:$0xff]
    %v248 = vld [vmem:[#allocation2 + $0x290] sm:$0xff]
    %v249 = vld [vmem:[#allocation2 + $0x298] sm:$0xff]
    %v250 = vld [vmem:[#allocation2 + $0x2a0] sm:$0xff]
    %v251 = vld [vmem:[#allocation2 + $0x2a8] sm:$0xff]
    %v252 = vld [vmem:[#allocation2 + $0x2b0] sm:$0xff]
    %v253 = vld [vmem:[#allocation2 + $0x2b8] sm:$0xff]
    %v254 = vld [vmem:[#allocation2 + $0x2c0] sm:$0xff]
    %v255 = vld [vmem:[#allocation2 + $0x2c8] sm:$0xff]
    %v256 = vld [vmem:[#allocation2 + $0x2d0] sm:$0xff]
    %v257 = vld [vmem:[#allocation2 + $0x2d8] sm:$0xff]
    %v258 = vld [vmem:[#allocation2 + $0x2e0] sm:$0xff]
    %v259 = vld [vmem:[#allocation2 + $0x2e8] sm:$0xff]
    %v260 = vld [vmem:[#allocation2 + $0x2f0] sm:$0xff]
    %v261 = vld [vmem:[#allocation2 + $0x2f8] sm:$0xff]
    %v262 = vld [vmem:[#allocation2 + $0x300] sm:$0xff]
    %v263 = vld [vmem:[#allocation2 + $0x308] sm:$0xff]
    %v264 = vld [vmem:[#allocation2 + $0x310] sm:$0xff]
    %v265 = vld [vmem:[#allocation2 + $0x318] sm:$0xff]
    %v266 = vld [vmem:[#allocation2 + $0x320] sm:$0xff]
    %v267 = vld [vmem:[#allocation2 + $0x328] sm:$0xff]
    %v268 = vld [vmem:[#allocation2 + $0x330] sm:$0xff]
    %v269 = vld [vmem:[#allocation2 + $0x338] sm:$0xff]
    %v270 = vld [vmem:[#allocation2 + $0x340] sm:$0xff]
    %v271 = vld [vmem:[#allocation2 + $0x348] sm:$0xff]
    %v272 = vld [vmem:[#allocation2 + $0x350] sm:$0xff]
    %v273 = vld [vmem:[#allocation2 + $0x358] sm:$0xff]
    %v274 = vld [vmem:[#allocation2 + $0x360] sm:$0xff]
    %v275 = vld [vmem:[#allocation2 + $0x368] sm:$0xff]
    %v276 = vld [vmem:[#allocation2 + $0x370] sm:$0xff]
    %v277 = vld [vmem:[#allocation2 + $0x378] sm:$0xff]
    %v278 = vld [vmem:[#allocation2 + $0x380] sm:$0xff]
    %v279 = vld [vmem:[#allocation2 + $0x388] sm:$0xff]
    %v280 = vld [vmem:[#allocation2 + $0x390] sm:$0xff]
    %v281 = vld [vmem:[#allocation2 + $0x398] sm:$0xff]
    %v282 = vld [vmem:[#allocation2 + $0x3a0] sm:$0xff]
    %v283 = vld [vmem:[#allocation2 + $0x3a8] sm:$0xff]
    %v284 = vld [vmem:[#allocation2 + $0x3b0] sm:$0xff]
    %v285 = vld [vmem:[#allocation2 + $0x3b8] sm:$0xff]
    %v286 = vld [vmem:[#allocation2 + $0x3c0] sm:$0xff]
    %v287 = vld [vmem:[#allocation2 + $0x3c8] sm:$0xff]
    %v288 = vld [vmem:[#allocation2 + $0x3d0] sm:$0xff]
    %v289 = vld [vmem:[#allocation2 + $0x3d8] sm:$0xff]
    %v290 = vld [vmem:[#allocation2 + $0x3e0] sm:$0xff]
    %v291 = vld [vmem:[#allocation2 + $0x3e8] sm:$0xff]
    %v292 = vld [vmem:[#allocation2 + $0x3f0] sm:$0xff]
    %v293 = vld [vmem:[#allocation2 + $0x3f8] sm:$0xff]
    %v294 = vld [vmem:[%s3] sm:$0xf]
    %v296 = vlaneseq
    %v297 = vshrl.u32 %v296, 7
    %v298 = vsub.s32 0, %v297
    %v299 = vrot.slane %v294, %v298
    %v300 = vlaneseq
    %v301 = vshrl.u32 %v300, 7
    %v302 = vsub.s32 1, %v301
    %v303 = vrot.slane %v294, %v302
    %v304 = vlaneseq
    %v305 = vshrl.u32 %v304, 7
    %v306 = vsub.s32 2, %v305
    %v307 = vrot.slane %v294, %v306
    %v308 = vlaneseq
    %v309 = vshrl.u32 %v308, 7
    %v310 = vsub.s32 3, %v309
    %v311 = vrot.slane %v294, %v310
    %v444 = vunpack.c.l.b16 %v166
    %v445 = vunpack.c.h.b16 %v166
    %v446 = vunpack.c.l.b16 %v167
    %v447 = vunpack.c.h.b16 %v167
    %v448 = vunpack.c.l.b16 %v168
    %v449 = vunpack.c.h.b16 %v168
    %v450 = vunpack.c.l.b16 %v169
    %v451 = vunpack.c.h.b16 %v169
    %v452 = vunpack.c.l.b16 %v170
    %v453 = vunpack.c.h.b16 %v170
    %v454 = vunpack.c.l.b16 %v171
    %v455 = vunpack.c.h.b16 %v171
    %v456 = vunpack.c.l.b16 %v172
    %v457 = vunpack.c.h.b16 %v172
    %v458 = vunpack.c.l.b16 %v173
    %v459 = vunpack.c.h.b16 %v173
    %v460 = vunpack.c.l.b16 %v174
    %v461 = vunpack.c.h.b16 %v174
    %v462 = vunpack.c.l.b16 %v175
    %v463 = vunpack.c.h.b16 %v175
    %v464 = vunpack.c.l.b16 %v176
    %v465 = vunpack.c.h.b16 %v176
    %v466 = vunpack.c.l.b16 %v177
    %v467 = vunpack.c.h.b16 %v177
    %v468 = vunpack.c.l.b16 %v178
    %v469 = vunpack.c.h.b16 %v178
    %v470 = vunpack.c.l.b16 %v179
    %v471 = vunpack.c.h.b16 %v179
    %v472 = vunpack.c.l.b16 %v180
    %v473 = vunpack.c.h.b16 %v180
    %v474 = vunpack.c.l.b16 %v181
    %v475 = vunpack.c.h.b16 %v181
    %v476 = vunpack.c.l.b16 %v182
    %v477 = vunpack.c.h.b16 %v182
    %v478 = vunpack.c.l.b16 %v183
    %v479 = vunpack.c.h.b16 %v183
    %v480 = vunpack.c.l.b16 %v184
    %v481 = vunpack.c.h.b16 %v184
    %v482 = vunpack.c.l.b16 %v185
    %v483 = vunpack.c.h.b16 %v185
    %v484 = vunpack.c.l.b16 %v186
    %v485 = vunpack.c.h.b16 %v186
    %v486 = vunpack.c.l.b16 %v187
    %v487 = vunpack.c.h.b16 %v187
    %v488 = vunpack.c.l.b16 %v188
    %v489 = vunpack.c.h.b16 %v188
    %v490 = vunpack.c.l.b16 %v189
    %v491 = vunpack.c.h.b16 %v189
    %v492 = vunpack.c.l.b16 %v190
    %v493 = vunpack.c.h.b16 %v190
    %v494 = vunpack.c.l.b16 %v191
    %v495 = vunpack.c.h.b16 %v191
    %v496 = vunpack.c.l.b16 %v192
    %v497 = vunpack.c.h.b16 %v192
    %v498 = vunpack.c.l.b16 %v193
    %v499 = vunpack.c.h.b16 %v193
    %v500 = vunpack.c.l.b16 %v194
    %v501 = vunpack.c.h.b16 %v194
    %v502 = vunpack.c.l.b16 %v195
    %v503 = vunpack.c.h.b16 %v195
    %v504 = vunpack.c.l.b16 %v196
    %v505 = vunpack.c.h.b16 %v196
    %v506 = vunpack.c.l.b16 %v197
    %v507 = vunpack.c.h.b16 %v197
    %v508 = vunpack.c.l.b16 %v198
    %v509 = vunpack.c.h.b16 %v198
    %v510 = vunpack.c.l.b16 %v199
    %v511 = vunpack.c.h.b16 %v199
    %v512 = vunpack.c.l.b16 %v200
    %v513 = vunpack.c.h.b16 %v200
    %v514 = vunpack.c.l.b16 %v201
    %v515 = vunpack.c.h.b16 %v201
    %v516 = vunpack.c.l.b16 %v202
    %v517 = vunpack.c.h.b16 %v202
    %v518 = vunpack.c.l.b16 %v203
    %v519 = vunpack.c.h.b16 %v203
    %v520 = vunpack.c.l.b16 %v204
    %v521 = vunpack.c.h.b16 %v204
    %v522 = vunpack.c.l.b16 %v205
    %v523 = vunpack.c.h.b16 %v205
    %v524 = vunpack.c.l.b16 %v206
    %v525 = vunpack.c.h.b16 %v206
    %v526 = vunpack.c.l.b16 %v207
    %v527 = vunpack.c.h.b16 %v207
    %v528 = vunpack.c.l.b16 %v208
    %v529 = vunpack.c.h.b16 %v208
    %v530 = vunpack.c.l.b16 %v209
    %v531 = vunpack.c.h.b16 %v209
    %v532 = vunpack.c.l.b16 %v210
    %v533 = vunpack.c.h.b16 %v210
    %v534 = vunpack.c.l.b16 %v211
    %v535 = vunpack.c.h.b16 %v211
    %v536 = vunpack.c.l.b16 %v212
    %v537 = vunpack.c.h.b16 %v212
    %v538 = vunpack.c.l.b16 %v213
    %v539 = vunpack.c.h.b16 %v213
    %v540 = vunpack.c.l.b16 %v214
    %v541 = vunpack.c.h.b16 %v214
    %v542 = vunpack.c.l.b16 %v215
    %v543 = vunpack.c.h.b16 %v215
    %v544 = vunpack.c.l.b16 %v216
    %v545 = vunpack.c.h.b16 %v216
    %v546 = vunpack.c.l.b16 %v217
    %v547 = vunpack.c.h.b16 %v217
    %v548 = vunpack.c.l.b16 %v218
    %v549 = vunpack.c.h.b16 %v218
    %v550 = vunpack.c.l.b16 %v219
    %v551 = vunpack.c.h.b16 %v219
    %v552 = vunpack.c.l.b16 %v220
    %v553 = vunpack.c.h.b16 %v220
    %v554 = vunpack.c.l.b16 %v221
    %v555 = vunpack.c.h.b16 %v221
    %v556 = vunpack.c.l.b16 %v222
    %v557 = vunpack.c.h.b16 %v222
    %v558 = vunpack.c.l.b16 %v223
    %v559 = vunpack.c.h.b16 %v223
    %v560 = vunpack.c.l.b16 %v224
    %v561 = vunpack.c.h.b16 %v224
    %v562 = vunpack.c.l.b16 %v225
    %v563 = vunpack.c.h.b16 %v225
    %v564 = vunpack.c.l.b16 %v226
    %v565 = vunpack.c.h.b16 %v226
    %v566 = vunpack.c.l.b16 %v227
    %v567 = vunpack.c.h.b16 %v227
    %v568 = vunpack.c.l.b16 %v228
    %v569 = vunpack.c.h.b16 %v228
    %v570 = vunpack.c.l.b16 %v229
    %v571 = vunpack.c.h.b16 %v229
    %v572 = vunpack.c.l.b16 %v230
    %v573 = vunpack.c.h.b16 %v230
    %v574 = vunpack.c.l.b16 %v231
    %v575 = vunpack.c.h.b16 %v231
    %v576 = vunpack.c.l.b16 %v232
    %v577 = vunpack.c.h.b16 %v232
    %v578 = vunpack.c.l.b16 %v233
    %v579 = vunpack.c.h.b16 %v233
    %v580 = vunpack.c.l.b16 %v234
    %v581 = vunpack.c.h.b16 %v234
    %v582 = vunpack.c.l.b16 %v235
    %v583 = vunpack.c.h.b16 %v235
    %v584 = vunpack.c.l.b16 %v236
    %v585 = vunpack.c.h.b16 %v236
    %v586 = vunpack.c.l.b16 %v237
    %v587 = vunpack.c.h.b16 %v237
    %v588 = vunpack.c.l.b16 %v238
    %v589 = vunpack.c.h.b16 %v238
    %v590 = vunpack.c.l.b16 %v239
    %v591 = vunpack.c.h.b16 %v239
    %v592 = vunpack.c.l.b16 %v240
    %v593 = vunpack.c.h.b16 %v240
    %v594 = vunpack.c.l.b16 %v241
    %v595 = vunpack.c.h.b16 %v241
    %v596 = vunpack.c.l.b16 %v242
    %v597 = vunpack.c.h.b16 %v242
    %v598 = vunpack.c.l.b16 %v243
    %v599 = vunpack.c.h.b16 %v243
    %v600 = vunpack.c.l.b16 %v244
    %v601 = vunpack.c.h.b16 %v244
    %v602 = vunpack.c.l.b16 %v245
    %v603 = vunpack.c.h.b16 %v245
    %v604 = vunpack.c.l.b16 %v246
    %v605 = vunpack.c.h.b16 %v246
    %v606 = vunpack.c.l.b16 %v247
    %v607 = vunpack.c.h.b16 %v247
    %v608 = vunpack.c.l.b16 %v248
    %v609 = vunpack.c.h.b16 %v248
    %v610 = vunpack.c.l.b16 %v249
    %v611 = vunpack.c.h.b16 %v249
    %v612 = vunpack.c.l.b16 %v250
    %v613 = vunpack.c.h.b16 %v250
    %v614 = vunpack.c.l.b16 %v251
    %v615 = vunpack.c.h.b16 %v251
    %v616 = vunpack.c.l.b16 %v252
    %v617 = vunpack.c.h.b16 %v252
    %v618 = vunpack.c.l.b16 %v253
    %v619 = vunpack.c.h.b16 %v253
    %v620 = vunpack.c.l.b16 %v254
    %v621 = vunpack.c.h.b16 %v254
    %v622 = vunpack.c.l.b16 %v255
    %v623 = vunpack.c.h.b16 %v255
    %v624 = vunpack.c.l.b16 %v256
    %v625 = vunpack.c.h.b16 %v256
    %v626 = vunpack.c.l.b16 %v257
    %v627 = vunpack.c.h.b16 %v257
    %v628 = vunpack.c.l.b16 %v258
    %v629 = vunpack.c.h.b16 %v258
    %v630 = vunpack.c.l.b16 %v259
    %v631 = vunpack.c.h.b16 %v259
    %v632 = vunpack.c.l.b16 %v260
    %v633 = vunpack.c.h.b16 %v260
    %v634 = vunpack.c.l.b16 %v261
    %v635 = vunpack.c.h.b16 %v261
    %v636 = vunpack.c.l.b16 %v262
    %v637 = vunpack.c.h.b16 %v262
    %v638 = vunpack.c.l.b16 %v263
    %v639 = vunpack.c.h.b16 %v263
    %v640 = vunpack.c.l.b16 %v264
    %v641 = vunpack.c.h.b16 %v264
    %v642 = vunpack.c.l.b16 %v265
    %v643 = vunpack.c.h.b16 %v265
    %v644 = vunpack.c.l.b16 %v266
    %v645 = vunpack.c.h.b16 %v266
    %v646 = vunpack.c.l.b16 %v267
    %v647 = vunpack.c.h.b16 %v267
    %v648 = vunpack.c.l.b16 %v268
    %v649 = vunpack.c.h.b16 %v268
    %v650 = vunpack.c.l.b16 %v269
    %v651 = vunpack.c.h.b16 %v269
    %v652 = vunpack.c.l.b16 %v270
    %v653 = vunpack.c.h.b16 %v270
    %v654 = vunpack.c.l.b16 %v271
    %v655 = vunpack.c.h.b16 %v271
    %v656 = vunpack.c.l.b16 %v272
    %v657 = vunpack.c.h.b16 %v272
    %v658 = vunpack.c.l.b16 %v273
    %v659 = vunpack.c.h.b16 %v273
    %v660 = vunpack.c.l.b16 %v274
    %v661 = vunpack.c.h.b16 %v274
    %v662 = vunpack.c.l.b16 %v275
    %v663 = vunpack.c.h.b16 %v275
    %v664 = vunpack.c.l.b16 %v276
    %v665 = vunpack.c.h.b16 %v276
    %v666 = vunpack.c.l.b16 %v277
    %v667 = vunpack.c.h.b16 %v277
    %v668 = vunpack.c.l.b16 %v278
    %v669 = vunpack.c.h.b16 %v278
    %v670 = vunpack.c.l.b16 %v279
    %v671 = vunpack.c.h.b16 %v279
    %v672 = vunpack.c.l.b16 %v280
    %v673 = vunpack.c.h.b16 %v280
    %v674 = vunpack.c.l.b16 %v281
    %v675 = vunpack.c.h.b16 %v281
    %v676 = vunpack.c.l.b16 %v282
    %v677 = vunpack.c.h.b16 %v282
    %v678 = vunpack.c.l.b16 %v283
    %v679 = vunpack.c.h.b16 %v283
    %v680 = vunpack.c.l.b16 %v284
    %v681 = vunpack.c.h.b16 %v284
    %v682 = vunpack.c.l.b16 %v285
    %v683 = vunpack.c.h.b16 %v285
    %v684 = vunpack.c.l.b16 %v286
    %v685 = vunpack.c.h.b16 %v286
    %v686 = vunpack.c.l.b16 %v287
    %v687 = vunpack.c.h.b16 %v287
    %v688 = vunpack.c.l.b16 %v288
    %v689 = vunpack.c.h.b16 %v288
    %v690 = vunpack.c.l.b16 %v289
    %v691 = vunpack.c.h.b16 %v289
    %v692 = vunpack.c.l.b16 %v290
    %v693 = vunpack.c.h.b16 %v290
    %v694 = vunpack.c.l.b16 %v291
    %v695 = vunpack.c.h.b16 %v291
    %v696 = vunpack.c.l.b16 %v292
    %v697 = vunpack.c.h.b16 %v292
    %v698 = vunpack.c.l.b16 %v293
    %v699 = vunpack.c.h.b16 %v293
    %v700 = vpack.c.b16 %v448, %v444
    %v701 = vpack.c.b16 %v449, %v445
    %v702 = vpack.c.b16 %v450, %v446
    %v703 = vpack.c.b16 %v451, %v447
    %v704 = vpack.c.b16 %v456, %v452
    %v705 = vpack.c.b16 %v457, %v453
    %v706 = vpack.c.b16 %v458, %v454
    %v707 = vpack.c.b16 %v459, %v455
    %v708 = vpack.c.b16 %v464, %v460
    %v709 = vpack.c.b16 %v465, %v461
    %v710 = vpack.c.b16 %v466, %v462
    %v711 = vpack.c.b16 %v467, %v463
    %v712 = vpack.c.b16 %v472, %v468
    %v713 = vpack.c.b16 %v473, %v469
    %v714 = vpack.c.b16 %v474, %v470
    %v715 = vpack.c.b16 %v475, %v471
    %v716 = vpack.c.b16 %v480, %v476
    %v717 = vpack.c.b16 %v481, %v477
    %v718 = vpack.c.b16 %v482, %v478
    %v719 = vpack.c.b16 %v483, %v479
    %v720 = vpack.c.b16 %v488, %v484
    %v721 = vpack.c.b16 %v489, %v485
    %v722 = vpack.c.b16 %v490, %v486
    %v723 = vpack.c.b16 %v491, %v487
    %v724 = vpack.c.b16 %v496, %v492
    %v725 = vpack.c.b16 %v497, %v493
    %v726 = vpack.c.b16 %v498, %v494
    %v727 = vpack.c.b16 %v499, %v495
    %v728 = vpack.c.b16 %v504, %v500
    %v729 = vpack.c.b16 %v505, %v501
    %v730 = vpack.c.b16 %v506, %v502
    %v731 = vpack.c.b16 %v507, %v503
    %v732 = vpack.c.b16 %v512, %v508
    %v733 = vpack.c.b16 %v513, %v509
    %v734 = vpack.c.b16 %v514, %v510
    %v735 = vpack.c.b16 %v515, %v511
    %v736 = vpack.c.b16 %v520, %v516
    %v737 = vpack.c.b16 %v521, %v517
    %v738 = vpack.c.b16 %v522, %v518
    %v739 = vpack.c.b16 %v523, %v519
    %v740 = vpack.c.b16 %v528, %v524
    %v741 = vpack.c.b16 %v529, %v525
    %v742 = vpack.c.b16 %v530, %v526
    %v743 = vpack.c.b16 %v531, %v527
    %v744 = vpack.c.b16 %v536, %v532
    %v745 = vpack.c.b16 %v537, %v533
    %v746 = vpack.c.b16 %v538, %v534
    %v747 = vpack.c.b16 %v539, %v535
    %v748 = vpack.c.b16 %v544, %v540
    %v749 = vpack.c.b16 %v545, %v541
    %v750 = vpack.c.b16 %v546, %v542
    %v751 = vpack.c.b16 %v547, %v543
    %v752 = vpack.c.b16 %v552, %v548
    %v753 = vpack.c.b16 %v553, %v549
    %v754 = vpack.c.b16 %v554, %v550
    %v755 = vpack.c.b16 %v555, %v551
    %v756 = vpack.c.b16 %v560, %v556
    %v757 = vpack.c.b16 %v561, %v557
    %v758 = vpack.c.b16 %v562, %v558
    %v759 = vpack.c.b16 %v563, %v559
    %v760 = vpack.c.b16 %v568, %v564
    %v761 = vpack.c.b16 %v569, %v565
    %v762 = vpack.c.b16 %v570, %v566
    %v763 = vpack.c.b16 %v571, %v567
    %v764 = vpack.c.b16 %v576, %v572
    %v765 = vpack.c.b16 %v577, %v573
    %v766 = vpack.c.b16 %v578, %v574
    %v767 = vpack.c.b16 %v579, %v575
    %v768 = vpack.c.b16 %v584, %v580
    %v769 = vpack.c.b16 %v585, %v581
    %v770 = vpack.c.b16 %v586, %v582
    %v771 = vpack.c.b16 %v587, %v583
    %v772 = vpack.c.b16 %v592, %v588
    %v773 = vpack.c.b16 %v593, %v589
    %v774 = vpack.c.b16 %v594, %v590
    %v775 = vpack.c.b16 %v595, %v591
    %v776 = vpack.c.b16 %v600, %v596
    %v777 = vpack.c.b16 %v601, %v597
    %v778 = vpack.c.b16 %v602, %v598
    %v779 = vpack.c.b16 %v603, %v599
    %v780 = vpack.c.b16 %v608, %v604
    %v781 = vpack.c.b16 %v609, %v605
    %v782 = vpack.c.b16 %v610, %v606
    %v783 = vpack.c.b16 %v611, %v607
    %v784 = vpack.c.b16 %v616, %v612
    %v785 = vpack.c.b16 %v617, %v613
    %v786 = vpack.c.b16 %v618, %v614
    %v787 = vpack.c.b16 %v619, %v615
    %v788 = vpack.c.b16 %v624, %v620
    %v789 = vpack.c.b16 %v625, %v621
    %v790 = vpack.c.b16 %v626, %v622
    %v791 = vpack.c.b16 %v627, %v623
    %v792 = vpack.c.b16 %v632, %v628
    %v793 = vpack.c.b16 %v633, %v629
    %v794 = vpack.c.b16 %v634, %v630
    %v795 = vpack.c.b16 %v635, %v631
    %v796 = vpack.c.b16 %v640, %v636
    %v797 = vpack.c.b16 %v641, %v637
    %v798 = vpack.c.b16 %v642, %v638
    %v799 = vpack.c.b16 %v643, %v639
    %v800 = vpack.c.b16 %v648, %v644
    %v801 = vpack.c.b16 %v649, %v645
    %v802 = vpack.c.b16 %v650, %v646
    %v803 = vpack.c.b16 %v651, %v647
    %v804 = vpack.c.b16 %v656, %v652
    %v805 = vpack.c.b16 %v657, %v653
    %v806 = vpack.c.b16 %v658, %v654
    %v807 = vpack.c.b16 %v659, %v655
    %v808 = vpack.c.b16 %v664, %v660
    %v809 = vpack.c.b16 %v665, %v661
    %v810 = vpack.c.b16 %v666, %v662
    %v811 = vpack.c.b16 %v667, %v663
    %v812 = vpack.c.b16 %v672, %v668
    %v813 = vpack.c.b16 %v673, %v669
    %v814 = vpack.c.b16 %v674, %v670
    %v815 = vpack.c.b16 %v675, %v671
    %v816 = vpack.c.b16 %v680, %v676
    %v817 = vpack.c.b16 %v681, %v677
    %v818 = vpack.c.b16 %v682, %v678
    %v819 = vpack.c.b16 %v683, %v679
    %v820 = vpack.c.b16 %v688, %v684
    %v821 = vpack.c.b16 %v689, %v685
    %v822 = vpack.c.b16 %v690, %v686
    %v823 = vpack.c.b16 %v691, %v687
    %v824 = vpack.c.b16 %v696, %v692
    %v825 = vpack.c.b16 %v697, %v693
    %v826 = vpack.c.b16 %v698, %v694
    %v827 = vpack.c.b16 %v699, %v695
    %956 = vmatprep.subr.bf16.mxu0 %v729
    %957 = vmatpush1.bf16.msra.mxu0 %v728
    %958 = vmatprep.subr.bf16.mxu0 %v725
    %959 = vmatpush1.bf16.msra.mxu0 %v724
    %960 = vmatprep.subr.bf16.mxu0 %v721
    %961 = vmatpush1.bf16.msra.mxu0 %v720
    %962 = vmatprep.subr.bf16.mxu0 %v717
    %963 = vmatpush1.bf16.msra.mxu0 %v716
    %964 = vmatprep.subr.bf16.mxu0 %v713
    %965 = vmatpush1.bf16.msra.mxu0 %v712
    %966 = vmatprep.subr.bf16.mxu0 %v709
    %967 = vmatpush1.bf16.msra.mxu0 %v708
    %968 = vmatprep.subr.bf16.mxu0 %v705
    %969 = vmatpush1.bf16.msra.mxu0 %v704
    %970 = vmatprep.subr.bf16.mxu0 %v701
    %971 = vmatpush1.bf16.msra.mxu0 %v700
    %972 = vmatprep.subr.bf16.mxu0 %v761
    %973 = vmatpush2.bf16.msra.mxu0 %v760
    %974 = vmatprep.subr.bf16.mxu0 %v757
    %975 = vmatpush2.bf16.msra.mxu0 %v756
    %976 = vmatprep.subr.bf16.mxu0 %v753
    %977 = vmatpush2.bf16.msra.mxu0 %v752
    %978 = vmatprep.subr.bf16.mxu0 %v749
    %979 = vmatpush2.bf16.msra.mxu0 %v748
    %980 = vmatprep.subr.bf16.mxu0 %v745
    %981 = vmatpush2.bf16.msra.mxu0 %v744
    %982 = vmatprep.subr.bf16.mxu0 %v741
    %983 = vmatpush2.bf16.msra.mxu0 %v740
    %984 = vmatprep.subr.bf16.mxu0 %v737
    %985 = vmatpush2.bf16.msra.mxu0 %v736
    %986 = vmatprep.subr.bf16.mxu0 %v733
    %987 = vmatpush2.bf16.msra.mxu0 %v732
    %988 = vmatprep.mubr.bf16.mxu0 %v109
    %989 = vmatmul.mubr.bf16.gmra.mxu0 %v108
    %v990 = vpop.f32.mrf.mxu0
    %v991 = vadd.f32 %v299, %v990
    %v992 = vpop.f32.mrf.mxu0
    %v993 = vadd.f32 %v303, %v992
    %v994 = vpop.f32.mrf.mxu0
    %v995 = vpop.f32.mrf.mxu0
    %996 = vdwg.mxu0
    %997 = vmatprep.subr.bf16.mxu0 %v793
    %998 = vmatpush1.bf16.msra.mxu0 %v792
    %999 = vmatprep.subr.bf16.mxu0 %v789
    %1000 = vmatpush1.bf16.msra.mxu0 %v788
    %1001 = vmatprep.subr.bf16.mxu0 %v785
    %1002 = vmatpush1.bf16.msra.mxu0 %v784
    %1003 = vmatprep.subr.bf16.mxu0 %v781
    %1004 = vmatpush1.bf16.msra.mxu0 %v780
    %1005 = vmatprep.subr.bf16.mxu0 %v777
    %1006 = vmatpush1.bf16.msra.mxu0 %v776
    %1007 = vmatprep.subr.bf16.mxu0 %v773
    %1008 = vmatpush1.bf16.msra.mxu0 %v772
    %1009 = vmatprep.subr.bf16.mxu0 %v769
    %1010 = vmatpush1.bf16.msra.mxu0 %v768
    %1011 = vmatprep.subr.bf16.mxu0 %v765
    %1012 = vmatpush1.bf16.msra.mxu0 %v764
    %1013 = vmatprep.subr.bf16.mxu0 %v825
    %1014 = vmatpush2.bf16.msra.mxu0 %v824
    %1015 = vmatprep.subr.bf16.mxu0 %v821
    %1016 = vmatpush2.bf16.msra.mxu0 %v820
    %1017 = vmatprep.subr.bf16.mxu0 %v817
    %1018 = vmatpush2.bf16.msra.mxu0 %v816
    %1019 = vmatprep.subr.bf16.mxu0 %v813
    %1020 = vmatpush2.bf16.msra.mxu0 %v812
    %1021 = vmatprep.subr.bf16.mxu0 %v809
    %1022 = vmatpush2.bf16.msra.mxu0 %v808
    %1023 = vmatprep.subr.bf16.mxu0 %v805
    %1024 = vmatpush2.bf16.msra.mxu0 %v804
    %1025 = vmatprep.subr.bf16.mxu0 %v801
    %1026 = vmatpush2.bf16.msra.mxu0 %v800
    %1027 = vmatprep.subr.bf16.mxu0 %v797
    %1028 = vmatpush2.bf16.msra.mxu0 %v796
    %1029 = vmatprep.mubr.bf16.mxu0 %v163
    %1030 = vmatmul.mubr.bf16.gmra.mxu0 %v162
    %v1031 = vpop.f32.mrf.mxu0
    %v1032 = vadd.f32 %v991, %v1031
    %v1033 = vpop.f32.mrf.mxu0
    %v1034 = vadd.f32 %v993, %v1033
    %v1035 = vpop.f32.mrf.mxu0
    %v1036 = vpop.f32.mrf.mxu0
    %1037 = vdwg.mxu0
    %1038 = vmatprep.subr.bf16.mxu0 %v731
    %1039 = vmatpush1.bf16.msra.mxu0 %v730
    %1040 = vmatprep.subr.bf16.mxu0 %v727
    %1041 = vmatpush1.bf16.msra.mxu0 %v726
    %1042 = vmatprep.subr.bf16.mxu0 %v723
    %1043 = vmatpush1.bf16.msra.mxu0 %v722
    %1044 = vmatprep.subr.bf16.mxu0 %v719
    %1045 = vmatpush1.bf16.msra.mxu0 %v718
    %1046 = vmatprep.subr.bf16.mxu0 %v715
    %1047 = vmatpush1.bf16.msra.mxu0 %v714
    %1048 = vmatprep.subr.bf16.mxu0 %v711
    %1049 = vmatpush1.bf16.msra.mxu0 %v710
    %1050 = vmatprep.subr.bf16.mxu0 %v707
    %1051 = vmatpush1.bf16.msra.mxu0 %v706
    %1052 = vmatprep.subr.bf16.mxu0 %v703
    %1053 = vmatpush1.bf16.msra.mxu0 %v702
    %1054 = vmatprep.subr.bf16.mxu0 %v763
    %1055 = vmatpush2.bf16.msra.mxu0 %v762
    %1056 = vmatprep.subr.bf16.mxu0 %v759
    %1057 = vmatpush2.bf16.msra.mxu0 %v758
    %1058 = vmatprep.subr.bf16.mxu0 %v755
    %1059 = vmatpush2.bf16.msra.mxu0 %v754
    %1060 = vmatprep.subr.bf16.mxu0 %v751
    %1061 = vmatpush2.bf16.msra.mxu0 %v750
    %1062 = vmatprep.subr.bf16.mxu0 %v747
    %1063 = vmatpush2.bf16.msra.mxu0 %v746
    %1064 = vmatprep.subr.bf16.mxu0 %v743
    %1065 = vmatpush2.bf16.msra.mxu0 %v742
    %1066 = vmatprep.subr.bf16.mxu0 %v739
    %1067 = vmatpush2.bf16.msra.mxu0 %v738
    %1068 = vmatprep.subr.bf16.mxu0 %v735
    %1069 = vmatpush2.bf16.msra.mxu0 %v734
    %1070 = vmatprep.mubr.bf16.mxu0 %v109
    %1071 = vmatmul.mubr.bf16.gmra.mxu0 %v108
    %v1072 = vpop.f32.mrf.mxu0
    %v1073 = vadd.f32 %v307, %v1072
    %v1074 = vpop.f32.mrf.mxu0
    %v1075 = vadd.f32 %v311, %v1074
    %v1076 = vpop.f32.mrf.mxu0
    %v1077 = vpop.f32.mrf.mxu0
    %1078 = vdwg.mxu0
    %1079 = vmatprep.subr.bf16.mxu0 %v795
    %1080 = vmatpush1.bf16.msra.mxu0 %v794
    %1081 = vmatprep.subr.bf16.mxu0 %v791
    %1082 = vmatpush1.bf16.msra.mxu0 %v790
    %1083 = vmatprep.subr.bf16.mxu0 %v787
    %1084 = vmatpush1.bf16.msra.mxu0 %v786
    %1085 = vmatprep.subr.bf16.mxu0 %v783
    %1086 = vmatpush1.bf16.msra.mxu0 %v782
    %1087 = vmatprep.subr.bf16.mxu0 %v779
    %1088 = vmatpush1.bf16.msra.mxu0 %v778
    %1089 = vmatprep.subr.bf16.mxu0 %v775
    %1090 = vmatpush1.bf16.msra.mxu0 %v774
    %1091 = vmatprep.subr.bf16.mxu0 %v771
    %1092 = vmatpush1.bf16.msra.mxu0 %v770
    %1093 = vmatprep.subr.bf16.mxu0 %v767
    %1094 = vmatpush1.bf16.msra.mxu0 %v766
    %1095 = vmatprep.subr.bf16.mxu0 %v827
    %1096 = vmatpush2.bf16.msra.mxu0 %v826
    %1097 = vmatprep.subr.bf16.mxu0 %v823
    %1098 = vmatpush2.bf16.msra.mxu0 %v822
    %1099 = vmatprep.subr.bf16.mxu0 %v819
    %1100 = vmatpush2.bf16.msra.mxu0 %v818
    %1101 = vmatprep.subr.bf16.mxu0 %v815
    %1102 = vmatpush2.bf16.msra.mxu0 %v814
    %1103 = vmatprep.subr.bf16.mxu0 %v811
    %1104 = vmatpush2.bf16.msra.mxu0 %v810
    %1105 = vmatprep.subr.bf16.mxu0 %v807
    %1106 = vmatpush2.bf16.msra.mxu0 %v806
    %1107 = vmatprep.subr.bf16.mxu0 %v803
    %1108 = vmatpush2.bf16.msra.mxu0 %v802
    %1109 = vmatprep.subr.bf16.mxu0 %v799
    %1110 = vmatpush2.bf16.msra.mxu0 %v798
    %1111 = vmatprep.mubr.bf16.mxu0 %v163
    %1112 = vmatmul.mubr.bf16.gmra.mxu0 %v162
    %v1113 = vpop.f32.mrf.mxu0
    %v1114 = vadd.f32 %v1073, %v1113
    %v1115 = vpop.f32.mrf.mxu0
    %v1116 = vadd.f32 %v1075, %v1115
    %v1117 = vpop.f32.mrf.mxu0
    %v1118 = vpop.f32.mrf.mxu0
    %1119 = vdwg.mxu0
    %v1120 = vrot.slane %v1032, 4
    %v1121 = vadd.f32 %v1032, %v1120
    %v1122 = vrot.slane %v1121, 2
    %v1123 = vadd.f32 %v1121, %v1122
    %v1124 = vrot.slane %v1123, 1
    %v1125 = vadd.f32 %v1123, %v1124
    %v1126 = vrot.slane %v1034, 4
    %v1127 = vadd.f32 %v1034, %v1126
    %v1128 = vrot.slane %v1127, 2
    %v1129 = vadd.f32 %v1127, %v1128
    %v1130 = vrot.slane %v1129, 1
    %v1131 = vadd.f32 %v1129, %v1130
    %v1132 = vrot.slane %v1114, 4
    %v1133 = vadd.f32 %v1114, %v1132
    %v1134 = vrot.slane %v1133, 2
    %v1135 = vadd.f32 %v1133, %v1134
    %v1136 = vrot.slane %v1135, 1
    %v1137 = vadd.f32 %v1135, %v1136
    %v1138 = vrot.slane %v1116, 4
    %v1139 = vadd.f32 %v1116, %v1138
    %v1140 = vrot.slane %v1139, 2
    %v1141 = vadd.f32 %v1139, %v1140
    %v1142 = vrot.slane %v1141, 1
    %v1143 = vadd.f32 %v1141, %v1142
    %v1144 = vadd.f32 %v1125, %v1137
    %v1145 = vadd.f32 %v1131, %v1143
    %v1146 = vmul.f32 %v1032, %v1032
    %v1147 = vmul.f32 %v1034, %v1034
    %v1148 = vrot.slane %v1146, 4
    %v1149 = vadd.f32 %v1146, %v1148
    %v1150 = vrot.slane %v1149, 2
    %v1151 = vadd.f32 %v1149, %v1150
    %v1152 = vrot.slane %v1151, 1
    %v1153 = vadd.f32 %v1151, %v1152
    %v1154 = vrot.slane %v1147, 4
    %v1155 = vadd.f32 %v1147, %v1154
    %v1156 = vrot.slane %v1155, 2
    %v1157 = vadd.f32 %v1155, %v1156
    %v1158 = vrot.slane %v1157, 1
    %v1159 = vadd.f32 %v1157, %v1158
    %v1160 = vmul.f32 %v1114, %v1114
    %v1161 = vmul.f32 %v1116, %v1116
    %v1162 = vrot.slane %v1160, 4
    %v1163 = vadd.f32 %v1160, %v1162
    %v1164 = vrot.slane %v1163, 2
    %v1165 = vadd.f32 %v1163, %v1164
    %v1166 = vrot.slane %v1165, 1
    %v1167 = vadd.f32 %v1165, %v1166
    %v1168 = vrot.slane %v1161, 4
    %v1169 = vadd.f32 %v1161, %v1168
    %v1170 = vrot.slane %v1169, 2
    %v1171 = vadd.f32 %v1169, %v1170
    %v1172 = vrot.slane %v1171, 1
    %v1173 = vadd.f32 %v1171, %v1172
    %v1174 = vadd.f32 %v1153, %v1167
    %v1175 = vadd.f32 %v1159, %v1173
    %vm1176 = vcmask 1040384
    %v1177 = vsel %vm1176, %v1144, %v1174
    %v1178 = vsel %vm1176, %v1145, %v1175
    %v1179 = vld [vmem:[#allocation4] sm:$0xff]
    %v1180 = vld [vmem:[#allocation4 + $0x8] sm:$0xff]
    %v1181 = vld [vmem:[#allocation4 + $0x10] sm:$0xff]
    %v1182 = vld [vmem:[#allocation4 + $0x18] sm:$0xff]
    %v1183 = vld [vmem:[#allocation4 + $0x20] sm:$0xff]
    %v1184 = vld [vmem:[#allocation4 + $0x28] sm:$0xff]
    %v1185 = vld [vmem:[#allocation4 + $0x30] sm:$0xff]
    %v1186 = vld [vmem:[#allocation4 + $0x38] sm:$0xff]
    %v1187 = vld [vmem:[#allocation4 + $0x40] sm:$0xff]
    %v1188 = vld [vmem:[#allocation4 + $0x48] sm:$0xff]
    %v1189 = vld [vmem:[#allocation4 + $0x50] sm:$0xff]
    %v1190 = vld [vmem:[#allocation4 + $0x58] sm:$0xff]
    %v1191 = vld [vmem:[#allocation4 + $0x60] sm:$0xff]
    %v1192 = vld [vmem:[#allocation4 + $0x68] sm:$0xff]
    %v1193 = vld [vmem:[#allocation4 + $0x70] sm:$0xff]
    %v1194 = vld [vmem:[#allocation4 + $0x78] sm:$0xff]
    %v1195 = vld [vmem:[#allocation4 + $0x80] sm:$0xff]
    %v1196 = vld [vmem:[#allocation4 + $0x88] sm:$0xff]
    %v1197 = vld [vmem:[#allocation4 + $0x90] sm:$0xff]
    %v1198 = vld [vmem:[#allocation4 + $0x98] sm:$0xff]
    %v1199 = vld [vmem:[#allocation4 + $0xa0] sm:$0xff]
    %v1200 = vld [vmem:[#allocation4 + $0xa8] sm:$0xff]
    %v1201 = vld [vmem:[#allocation4 + $0xb0] sm:$0xff]
    %v1202 = vld [vmem:[#allocation4 + $0xb8] sm:$0xff]
    %v1203 = vld [vmem:[#allocation4 + $0xc0] sm:$0xff]
    %v1204 = vld [vmem:[#allocation4 + $0xc8] sm:$0xff]
    %v1205 = vld [vmem:[#allocation4 + $0xd0] sm:$0xff]
    %v1206 = vld [vmem:[#allocation4 + $0xd8] sm:$0xff]
    %v1207 = vld [vmem:[#allocation4 + $0xe0] sm:$0xff]
    %v1208 = vld [vmem:[#allocation4 + $0xe8] sm:$0xff]
    %v1209 = vld [vmem:[#allocation4 + $0xf0] sm:$0xff]
    %v1210 = vld [vmem:[#allocation4 + $0xf8] sm:$0xff]
    %v1211 = vld [vmem:[#allocation4 + $0x100] sm:$0xff]
    %v1212 = vld [vmem:[#allocation4 + $0x108] sm:$0xff]
    %v1213 = vld [vmem:[#allocation4 + $0x110] sm:$0xff]
    %v1214 = vld [vmem:[#allocation4 + $0x118] sm:$0xff]
    %v1215 = vld [vmem:[#allocation4 + $0x120] sm:$0xff]
    %v1216 = vld [vmem:[#allocation4 + $0x128] sm:$0xff]
    %v1217 = vld [vmem:[#allocation4 + $0x130] sm:$0xff]
    %v1218 = vld [vmem:[#allocation4 + $0x138] sm:$0xff]
    %v1219 = vld [vmem:[#allocation4 + $0x140] sm:$0xff]
    %v1220 = vld [vmem:[#allocation4 + $0x148] sm:$0xff]
    %v1221 = vld [vmem:[#allocation4 + $0x150] sm:$0xff]
    %v1222 = vld [vmem:[#allocation4 + $0x158] sm:$0xff]
    %v1223 = vld [vmem:[#allocation4 + $0x160] sm:$0xff]
    %v1224 = vld [vmem:[#allocation4 + $0x168] sm:$0xff]
    %v1225 = vld [vmem:[#allocation4 + $0x170] sm:$0xff]
    %v1226 = vld [vmem:[#allocation4 + $0x178] sm:$0xff]
    %v1227 = vld [vmem:[#allocation4 + $0x180] sm:$0xff]
    %v1228 = vld [vmem:[#allocation4 + $0x188] sm:$0xff]
    %v1229 = vld [vmem:[#allocation4 + $0x190] sm:$0xff]
    %v1230 = vld [vmem:[#allocation4 + $0x198] sm:$0xff]
    %v1231 = vld [vmem:[#allocation4 + $0x1a0] sm:$0xff]
    %v1232 = vld [vmem:[#allocation4 + $0x1a8] sm:$0xff]
    %v1233 = vld [vmem:[#allocation4 + $0x1b0] sm:$0xff]
    %v1234 = vld [vmem:[#allocation4 + $0x1b8] sm:$0xff]
    %v1235 = vld [vmem:[#allocation4 + $0x1c0] sm:$0xff]
    %v1236 = vld [vmem:[#allocation4 + $0x1c8] sm:$0xff]
    %v1237 = vld [vmem:[#allocation4 + $0x1d0] sm:$0xff]
    %v1238 = vld [vmem:[#allocation4 + $0x1d8] sm:$0xff]
    %v1239 = vld [vmem:[#allocation4 + $0x1e0] sm:$0xff]
    %v1240 = vld [vmem:[#allocation4 + $0x1e8] sm:$0xff]
    %v1241 = vld [vmem:[#allocation4 + $0x1f0] sm:$0xff]
    %v1242 = vld [vmem:[#allocation4 + $0x1f8] sm:$0xff]
    %1243 = vmatprep.subr.mxu0 %v1210
    %1244 = vmatpush1.msra.mxu0 %v1209
    %1245 = vmatprep.subr.mxu0 %v1208
    %1246 = vmatpush1.msra.mxu0 %v1207
    %1247 = vmatprep.subr.mxu0 %v1206
    %1248 = vmatpush1.msra.mxu0 %v1205
    %1249 = vmatprep.subr.mxu0 %v1204
    %1250 = vmatpush1.msra.mxu0 %v1203
    %1251 = vmatprep.subr.mxu0 %v1202
    %1252 = vmatpush1.msra.mxu0 %v1201
    %1253 = vmatprep.subr.mxu0 %v1200
    %1254 = vmatpush1.msra.mxu0 %v1199
    %1255 = vmatprep.subr.mxu0 %v1198
    %1256 = vmatpush1.msra.mxu0 %v1197
    %1257 = vmatprep.subr.mxu0 %v1196
    %1258 = vmatpush1.msra.mxu0 %v1195
    %1259 = vmatprep.subr.mxu0 %v1194
    %1260 = vmatpush1.msra.mxu0 %v1193
    %1261 = vmatprep.subr.mxu0 %v1192
    %1262 = vmatpush1.msra.mxu0 %v1191
    %1263 = vmatprep.subr.mxu0 %v1190
    %1264 = vmatpush1.msra.mxu0 %v1189
    %1265 = vmatprep.subr.mxu0 %v1188
    %1266 = vmatpush1.msra.mxu0 %v1187
    %1267 = vmatprep.subr.mxu0 %v1186
    %1268 = vmatpush1.msra.mxu0 %v1185
    %1269 = vmatprep.subr.mxu0 %v1184
    %1270 = vmatpush1.msra.mxu0 %v1183
    %1271 = vmatprep.subr.mxu0 %v1182
    %1272 = vmatpush1.msra.mxu0 %v1181
    %1273 = vmatprep.subr.mxu0 %v1180
    %1274 = vmatpush1.msra.mxu0 %v1179
    %1275 = vmatprep.subr.mxu0 %v1242
    %1276 = vmatpush2.msra.mxu0 %v1241
    %1277 = vmatprep.subr.mxu0 %v1240
    %1278 = vmatpush2.msra.mxu0 %v1239
    %1279 = vmatprep.subr.mxu0 %v1238
    %1280 = vmatpush2.msra.mxu0 %v1237
    %1281 = vmatprep.subr.mxu0 %v1236
    %1282 = vmatpush2.msra.mxu0 %v1235
    %1283 = vmatprep.subr.mxu0 %v1234
    %1284 = vmatpush2.msra.mxu0 %v1233
    %1285 = vmatprep.subr.mxu0 %v1232
    %1286 = vmatpush2.msra.mxu0 %v1231
    %1287 = vmatprep.subr.mxu0 %v1230
    %1288 = vmatpush2.msra.mxu0 %v1229
    %1289 = vmatprep.subr.mxu0 %v1228
    %1290 = vmatpush2.msra.mxu0 %v1227
    %1291 = vmatprep.subr.mxu0 %v1226
    %1292 = vmatpush2.msra.mxu0 %v1225
    %1293 = vmatprep.subr.mxu0 %v1224
    %1294 = vmatpush2.msra.mxu0 %v1223
    %1295 = vmatprep.subr.mxu0 %v1222
    %1296 = vmatpush2.msra.mxu0 %v1221
    %1297 = vmatprep.subr.mxu0 %v1220
    %1298 = vmatpush2.msra.mxu0 %v1219
    %1299 = vmatprep.subr.mxu0 %v1218
    %1300 = vmatpush2.msra.mxu0 %v1217
    %1301 = vmatprep.subr.mxu0 %v1216
    %1302 = vmatpush2.msra.mxu0 %v1215
    %1303 = vmatprep.subr.mxu0 %v1214
    %1304 = vmatpush2.msra.mxu0 %v1213
    %1305 = vmatprep.subr.mxu0 %v1212
    %1306 = vmatpush2.msra.mxu0 %v1211
    %1307 = vmatprep.mubr.f32.mxu0 %v1178
    %1308 = vmatmul.mubr.f32.gmra.mxu0 %v1177
    %v1309 = vpop.f32.mrf.mxu0
    %v1310 = vadd.f32 0.0, %v1309
    %v1311 = vpop.f32.mrf.mxu0
    %v1312 = vadd.f32 0.0, %v1311
    %1313 = vdwg.mxu0
    %v1314 = vmul.f32 %v1310, %v1310
    %v1315 = vmul.f32 %v1312, %v1312
    %v1318 = vrot.slane %v1314, 7
    %v1319 = vrot.slane %v1315, 7
    %v1322 = vsub.f32 %v1310, %v1318
    %v1323 = vsub.f32 %v1312, %v1319
    %v1324 = vadd.f32 %v1322, 1e-05
    %v1325 = vadd.f32 %v1323, 1e-05
    %v1326 = vrsqrt.pop %v1324
    %v1327 = vrsqrt.pop %v1325
    %v1328 = vld [vmem:[%s5] sm:$0x3]
    %v1330 = vlaneseq
    %v1331 = vshrl.u32 %v1330, 7
    %v1332 = vsub.s32 0, %v1331
    %v1333 = vrot.slane %v1328, %v1332
    %v1334 = vlaneseq
    %v1335 = vshrl.u32 %v1334, 7
    %v1336 = vsub.s32 1, %v1335
    %v1337 = vrot.slane %v1328, %v1336
    %v1340 = vmul.f32 %v1326, %v1333
    %v1341 = vmul.f32 %v1327, %v1337
    %v1342 = vld [vmem:[%s6] sm:$0x3]
    %v1345 = vrot.slane %v1340, 1
    %v1346 = vrot.slane %v1341, 1
    %v1349 = vmul.f32 %v1310, %v1345
    %v1350 = vmul.f32 %v1312, %v1346
    %v1353 = vcombine.low %v1349, %v1350
    %v1355 = vunpack.c.l.s4 1966171168
    %v1356 = vunpack.c.0.s8 %v1355
    %v1357 = vlaneseq
    %v1358 = vshrl.u32 %v1357, 7
    %v1359 = vsub.s32 %v1356, %v1358
    %v1360 = vrot.slane %v1353, %v1359
    %v1362 = vunpack.c.l.s4 1966171168
    %v1363 = vunpack.c.0.s8 %v1362
    %v1364 = vlaneseq
    %v1365 = vshrl.u32 %v1364, 7
    %v1366 = vsub.s32 %v1363, %v1365
    %v1367 = vrot.slane %v1360, %v1366
    %v1369 = vsub.f32 %v1342, %v1367
    %v1370 = vlaneseq
    %v1371 = vshrl.u32 %v1370, 7
    %v1372 = vsub.s32 1, %v1371
    %v1373 = vrot.slane %v1340, %v1372
    %v1374 = vlaneseq
    %v1375 = vshrl.u32 %v1374, 7
    %v1376 = vsub.s32 1, %v1375
    %v1377 = vrot.slane %v1341, %v1376
    %v1378 = vmul.f32 %v1032, %v1373
    %v1379 = vmul.f32 %v1034, %v1377
    %v1381 = vlaneseq
    %v1382 = vshrl.u32 %v1381, 7
    %v1383 = vsub.s32 0, %v1382
    %v1384 = vrot.slane %v1369, %v1383
    %v1385 = vlaneseq
    %v1386 = vshrl.u32 %v1385, 7
    %v1387 = vsub.s32 1, %v1386
    %v1388 = vrot.slane %v1369, %v1387
    %v1391 = vadd.f32 %v1378, %v1384
    %v1392 = vadd.f32 %v1379, %v1388
    %v1393 = vmax.f32 %v1391, 0.0
    %v1394 = vmax.f32 %v1392, 0.0
    %v1395 = vpack.c.bf16 %v1393, %v1393
    %v1396 = vpack.c.bf16 %v1394, %v1394
    %v1397 = vmul.f32 %v1114, %v1373
    %v1398 = vmul.f32 %v1116, %v1377
    %v1399 = vadd.f32 %v1397, %v1384
    %v1400 = vadd.f32 %v1398, %v1388
    %v1401 = vmax.f32 %v1399, 0.0
    %v1402 = vmax.f32 %v1400, 0.0
    %v1403 = vpack.c.bf16 %v1401, %v1401
    %v1404 = vpack.c.bf16 %v1402, %v1402
    %v1407 = vrot.slane %v1403, 4
    %v1408 = vrot.slane %v1404, 4
    %v1411 = vsel %vm114, %v1395, %v1407
    %v1415 = vsel %vm114, %v1396, %v1408
    %v1417 = vsel %vm114, %v1395, 0
    %v1419 = vsel %vm114, %v1396, 0
    %1421 = vmatprep.subr.bf16.mxu0 0
    %1422 = vmatpush1.bf16.msra.mxu0 0
    %1423 = vmatprep.subr.bf16.mxu0 0
    %1424 = vmatpush1.bf16.msra.mxu0 0
    %1425 = vmatprep.subr.bf16.mxu0 0
    %1426 = vmatpush1.bf16.msra.mxu0 0
    %1427 = vmatprep.subr.bf16.mxu0 0
    %1428 = vmatpush1.bf16.msra.mxu0 0
    %1429 = vmatprep.subr.bf16.mxu0 0
    %1430 = vmatpush1.bf16.msra.mxu0 0
    %1431 = vmatprep.subr.bf16.mxu0 0
    %1432 = vmatpush1.bf16.msra.mxu0 0
    %1433 = vmatprep.subr.bf16.mxu0 0
    %1434 = vmatpush1.bf16.msra.mxu0 0
    %1435 = vmatprep.subr.bf16.mxu0 %v1419
    %1436 = vmatpush1.bf16.msra.mxu0 %v1417
    %1437 = vmatprep.subr.bf16.mxu0 0
    %1438 = vmatpush2.bf16.msra.mxu0 0
    %1439 = vmatprep.subr.bf16.mxu0 0
    %1440 = vmatpush2.bf16.msra.mxu0 0
    %1441 = vmatprep.subr.bf16.mxu0 0
    %1442 = vmatpush2.bf16.msra.mxu0 0
    %1443 = vmatprep.subr.bf16.mxu0 0
    %1444 = vmatpush2.bf16.msra.mxu0 0
    %1445 = vmatprep.subr.bf16.mxu0 0
    %1446 = vmatpush2.bf16.msra.mxu0 0
    %1447 = vmatprep.subr.bf16.mxu0 0
    %1448 = vmatpush2.bf16.msra.mxu0 0
    %1449 = vmatprep.subr.bf16.mxu0 0
    %1450 = vmatpush2.bf16.msra.mxu0 0
    %1451 = vmatprep.subr.bf16.mxu0 0
    %1452 = vmatpush2.bf16.msra.mxu0 0
    %1453 = vmatprep.mubr.bf16.mxu0 0
    %1454 = vmatmul.mubr.bf16.gmra.mxu0 %v112
    %v1455 = vpop.f32.mrf.mxu0
    %v1456 = vadd.f32 0.0, %v1455
    %v1457 = vpop.f32.mrf.mxu0
    %v1458 = vadd.f32 0.0, %v1457
    %v1459 = vpop.f32.mrf.mxu0
    %v1460 = vpop.f32.mrf.mxu0
    %1461 = vdwg.mxu0
    %v1462 = vpack.c.bf16 %v1456, %v1456
    %v1463 = vpack.c.bf16 %v1458, %v1458
    %v1466 = vrot.slane %v1462, 4
    %v1467 = vrot.slane %v1463, 4
    %v1470 = vsel %vm114, %v1403, %v1466
    %v1474 = vsel %vm114, %v1404, %v1467
    %v1476 = vld [vmem:[#allocation6] sm:$0xff]
    %v1477 = vld [vmem:[#allocation6 + $0x8] sm:$0xff]
    %v1478 = vld [vmem:[#allocation6 + $0x10] sm:$0xff]
    %v1479 = vld [vmem:[#allocation6 + $0x18] sm:$0xff]
    %v1480 = vld [vmem:[#allocation6 + $0x20] sm:$0xff]
    %v1481 = vld [vmem:[#allocation6 + $0x28] sm:$0xff]
    %v1482 = vld [vmem:[#allocation6 + $0x30] sm:$0xff]
    %v1483 = vld [vmem:[#allocation6 + $0x38] sm:$0xff]
    %v1484 = vld [vmem:[#allocation6 + $0x40] sm:$0xff]
    %v1485 = vld [vmem:[#allocation6 + $0x48] sm:$0xff]
    %v1486 = vld [vmem:[#allocation6 + $0x50] sm:$0xff]
    %v1487 = vld [vmem:[#allocation6 + $0x58] sm:$0xff]
    %v1488 = vld [vmem:[#allocation6 + $0x60] sm:$0xff]
    %v1489 = vld [vmem:[#allocation6 + $0x68] sm:$0xff]
    %v1490 = vld [vmem:[#allocation6 + $0x70] sm:$0xff]
    %v1491 = vld [vmem:[#allocation6 + $0x78] sm:$0xff]
    %v1492 = vld [vmem:[#allocation6 + $0x80] sm:$0xff]
    %v1493 = vld [vmem:[#allocation6 + $0x88] sm:$0xff]
    %v1494 = vld [vmem:[#allocation6 + $0x90] sm:$0xff]
    %v1495 = vld [vmem:[#allocation6 + $0x98] sm:$0xff]
    %v1496 = vld [vmem:[#allocation6 + $0xa0] sm:$0xff]
    %v1497 = vld [vmem:[#allocation6 + $0xa8] sm:$0xff]
    %v1498 = vld [vmem:[#allocation6 + $0xb0] sm:$0xff]
    %v1499 = vld [vmem:[#allocation6 + $0xb8] sm:$0xff]
    %v1500 = vld [vmem:[#allocation6 + $0xc0] sm:$0xff]
    %v1501 = vld [vmem:[#allocation6 + $0xc8] sm:$0xff]
    %v1502 = vld [vmem:[#allocation6 + $0xd0] sm:$0xff]
    %v1503 = vld [vmem:[#allocation6 + $0xd8] sm:$0xff]
    %v1504 = vld [vmem:[#allocation6 + $0xe0] sm:$0xff]
    %v1505 = vld [vmem:[#allocation6 + $0xe8] sm:$0xff]
    %v1506 = vld [vmem:[#allocation6 + $0xf0] sm:$0xff]
    %v1507 = vld [vmem:[#allocation6 + $0xf8] sm:$0xff]
    %v1508 = vld [vmem:[#allocation6 + $0x100] sm:$0xff]
    %v1509 = vld [vmem:[#allocation6 + $0x108] sm:$0xff]
    %v1510 = vld [vmem:[#allocation6 + $0x110] sm:$0xff]
    %v1511 = vld [vmem:[#allocation6 + $0x118] sm:$0xff]
    %v1512 = vld [vmem:[#allocation6 + $0x120] sm:$0xff]
    %v1513 = vld [vmem:[#allocation6 + $0x128] sm:$0xff]
    %v1514 = vld [vmem:[#allocation6 + $0x130] sm:$0xff]
    %v1515 = vld [vmem:[#allocation6 + $0x138] sm:$0xff]
    %v1516 = vld [vmem:[#allocation6 + $0x140] sm:$0xff]
    %v1517 = vld [vmem:[#allocation6 + $0x148] sm:$0xff]
    %v1518 = vld [vmem:[#allocation6 + $0x150] sm:$0xff]
    %v1519 = vld [vmem:[#allocation6 + $0x158] sm:$0xff]
    %v1520 = vld [vmem:[#allocation6 + $0x160] sm:$0xff]
    %v1521 = vld [vmem:[#allocation6 + $0x168] sm:$0xff]
    %v1522 = vld [vmem:[#allocation6 + $0x170] sm:$0xff]
    %v1523 = vld [vmem:[#allocation6 + $0x178] sm:$0xff]
    %v1524 = vld [vmem:[#allocation6 + $0x180] sm:$0xff]
    %v1525 = vld [vmem:[#allocation6 + $0x188] sm:$0xff]
    %v1526 = vld [vmem:[#allocation6 + $0x190] sm:$0xff]
    %v1527 = vld [vmem:[#allocation6 + $0x198] sm:$0xff]
    %v1528 = vld [vmem:[#allocation6 + $0x1a0] sm:$0xff]
    %v1529 = vld [vmem:[#allocation6 + $0x1a8] sm:$0xff]
    %v1530 = vld [vmem:[#allocation6 + $0x1b0] sm:$0xff]
    %v1531 = vld [vmem:[#allocation6 + $0x1b8] sm:$0xff]
    %v1532 = vld [vmem:[#allocation6 + $0x1c0] sm:$0xff]
    %v1533 = vld [vmem:[#allocation6 + $0x1c8] sm:$0xff]
    %v1534 = vld [vmem:[#allocation6 + $0x1d0] sm:$0xff]
    %v1535 = vld [vmem:[#allocation6 + $0x1d8] sm:$0xff]
    %v1536 = vld [vmem:[#allocation6 + $0x1e0] sm:$0xff]
    %v1537 = vld [vmem:[#allocation6 + $0x1e8] sm:$0xff]
    %v1538 = vld [vmem:[#allocation6 + $0x1f0] sm:$0xff]
    %v1539 = vld [vmem:[#allocation6 + $0x1f8] sm:$0xff]
    %v1540 = vld [vmem:[#allocation6 + $0x200] sm:$0xff]
    %v1541 = vld [vmem:[#allocation6 + $0x208] sm:$0xff]
    %v1542 = vld [vmem:[#allocation6 + $0x210] sm:$0xff]
    %v1543 = vld [vmem:[#allocation6 + $0x218] sm:$0xff]
    %v1544 = vld [vmem:[#allocation6 + $0x220] sm:$0xff]
    %v1545 = vld [vmem:[#allocation6 + $0x228] sm:$0xff]
    %v1546 = vld [vmem:[#allocation6 + $0x230] sm:$0xff]
    %v1547 = vld [vmem:[#allocation6 + $0x238] sm:$0xff]
    %v1548 = vld [vmem:[#allocation6 + $0x240] sm:$0xff]
    %v1549 = vld [vmem:[#allocation6 + $0x248] sm:$0xff]
    %v1550 = vld [vmem:[#allocation6 + $0x250] sm:$0xff]
    %v1551 = vld [vmem:[#allocation6 + $0x258] sm:$0xff]
    %v1552 = vld [vmem:[#allocation6 + $0x260] sm:$0xff]
    %v1553 = vld [vmem:[#allocation6 + $0x268] sm:$0xff]
    %v1554 = vld [vmem:[#allocation6 + $0x270] sm:$0xff]
    %v1555 = vld [vmem:[#allocation6 + $0x278] sm:$0xff]
    %v1556 = vld [vmem:[#allocation6 + $0x280] sm:$0xff]
    %v1557 = vld [vmem:[#allocation6 + $0x288] sm:$0xff]
    %v1558 = vld [vmem:[#allocation6 + $0x290] sm:$0xff]
    %v1559 = vld [vmem:[#allocation6 + $0x298] sm:$0xff]
    %v1560 = vld [vmem:[#allocation6 + $0x2a0] sm:$0xff]
    %v1561 = vld [vmem:[#allocation6 + $0x2a8] sm:$0xff]
    %v1562 = vld [vmem:[#allocation6 + $0x2b0] sm:$0xff]
    %v1563 = vld [vmem:[#allocation6 + $0x2b8] sm:$0xff]
    %v1564 = vld [vmem:[#allocation6 + $0x2c0] sm:$0xff]
    %v1565 = vld [vmem:[#allocation6 + $0x2c8] sm:$0xff]
    %v1566 = vld [vmem:[#allocation6 + $0x2d0] sm:$0xff]
    %v1567 = vld [vmem:[#allocation6 + $0x2d8] sm:$0xff]
    %v1568 = vld [vmem:[#allocation6 + $0x2e0] sm:$0xff]
    %v1569 = vld [vmem:[#allocation6 + $0x2e8] sm:$0xff]
    %v1570 = vld [vmem:[#allocation6 + $0x2f0] sm:$0xff]
    %v1571 = vld [vmem:[#allocation6 + $0x2f8] sm:$0xff]
    %v1572 = vld [vmem:[#allocation6 + $0x300] sm:$0xff]
    %v1573 = vld [vmem:[#allocation6 + $0x308] sm:$0xff]
    %v1574 = vld [vmem:[#allocation6 + $0x310] sm:$0xff]
    %v1575 = vld [vmem:[#allocation6 + $0x318] sm:$0xff]
    %v1576 = vld [vmem:[#allocation6 + $0x320] sm:$0xff]
    %v1577 = vld [vmem:[#allocation6 + $0x328] sm:$0xff]
    %v1578 = vld [vmem:[#allocation6 + $0x330] sm:$0xff]
    %v1579 = vld [vmem:[#allocation6 + $0x338] sm:$0xff]
    %v1580 = vld [vmem:[#allocation6 + $0x340] sm:$0xff]
    %v1581 = vld [vmem:[#allocation6 + $0x348] sm:$0xff]
    %v1582 = vld [vmem:[#allocation6 + $0x350] sm:$0xff]
    %v1583 = vld [vmem:[#allocation6 + $0x358] sm:$0xff]
    %v1584 = vld [vmem:[#allocation6 + $0x360] sm:$0xff]
    %v1585 = vld [vmem:[#allocation6 + $0x368] sm:$0xff]
    %v1586 = vld [vmem:[#allocation6 + $0x370] sm:$0xff]
    %v1587 = vld [vmem:[#allocation6 + $0x378] sm:$0xff]
    %v1588 = vld [vmem:[#allocation6 + $0x380] sm:$0xff]
    %v1589 = vld [vmem:[#allocation6 + $0x388] sm:$0xff]
    %v1590 = vld [vmem:[#allocation6 + $0x390] sm:$0xff]
    %v1591 = vld [vmem:[#allocation6 + $0x398] sm:$0xff]
    %v1592 = vld [vmem:[#allocation6 + $0x3a0] sm:$0xff]
    %v1593 = vld [vmem:[#allocation6 + $0x3a8] sm:$0xff]
    %v1594 = vld [vmem:[#allocation6 + $0x3b0] sm:$0xff]
    %v1595 = vld [vmem:[#allocation6 + $0x3b8] sm:$0xff]
    %v1596 = vld [vmem:[#allocation6 + $0x3c0] sm:$0xff]
    %v1597 = vld [vmem:[#allocation6 + $0x3c8] sm:$0xff]
    %v1598 = vld [vmem:[#allocation6 + $0x3d0] sm:$0xff]
    %v1599 = vld [vmem:[#allocation6 + $0x3d8] sm:$0xff]
    %v1600 = vld [vmem:[#allocation6 + $0x3e0] sm:$0xff]
    %v1601 = vld [vmem:[#allocation6 + $0x3e8] sm:$0xff]
    %v1602 = vld [vmem:[#allocation6 + $0x3f0] sm:$0xff]
    %v1603 = vld [vmem:[#allocation6 + $0x3f8] sm:$0xff]
    %v1604 = vld [vmem:[%s8] sm:$0xf]
    %v1606 = vlaneseq
    %v1607 = vshrl.u32 %v1606, 7
    %v1608 = vsub.s32 0, %v1607
    %v1609 = vrot.slane %v1604, %v1608
    %v1610 = vlaneseq
    %v1611 = vshrl.u32 %v1610, 7
    %v1612 = vsub.s32 1, %v1611
    %v1613 = vrot.slane %v1604, %v1612
    %v1614 = vlaneseq
    %v1615 = vshrl.u32 %v1614, 7
    %v1616 = vsub.s32 2, %v1615
    %v1617 = vrot.slane %v1604, %v1616
    %v1618 = vlaneseq
    %v1619 = vshrl.u32 %v1618, 7
    %v1620 = vsub.s32 3, %v1619
    %v1621 = vrot.slane %v1604, %v1620
    %v1754 = vunpack.c.l.b16 %v1476
    %v1755 = vunpack.c.h.b16 %v1476
    %v1756 = vunpack.c.l.b16 %v1477
    %v1757 = vunpack.c.h.b16 %v1477
    %v1758 = vunpack.c.l.b16 %v1478
    %v1759 = vunpack.c.h.b16 %v1478
    %v1760 = vunpack.c.l.b16 %v1479
    %v1761 = vunpack.c.h.b16 %v1479
    %v1762 = vunpack.c.l.b16 %v1480
    %v1763 = vunpack.c.h.b16 %v1480
    %v1764 = vunpack.c.l.b16 %v1481
    %v1765 = vunpack.c.h.b16 %v1481
    %v1766 = vunpack.c.l.b16 %v1482
    %v1767 = vunpack.c.h.b16 %v1482
    %v1768 = vunpack.c.l.b16 %v1483
    %v1769 = vunpack.c.h.b16 %v1483
    %v1770 = vunpack.c.l.b16 %v1484
    %v1771 = vunpack.c.h.b16 %v1484
    %v1772 = vunpack.c.l.b16 %v1485
    %v1773 = vunpack.c.h.b16 %v1485
    %v1774 = vunpack.c.l.b16 %v1486
    %v1775 = vunpack.c.h.b16 %v1486
    %v1776 = vunpack.c.l.b16 %v1487
    %v1777 = vunpack.c.h.b16 %v1487
    %v1778 = vunpack.c.l.b16 %v1488
    %v1779 = vunpack.c.h.b16 %v1488
    %v1780 = vunpack.c.l.b16 %v1489
    %v1781 = vunpack.c.h.b16 %v1489
    %v1782 = vunpack.c.l.b16 %v1490
    %v1783 = vunpack.c.h.b16 %v1490
    %v1784 = vunpack.c.l.b16 %v1491
    %v1785 = vunpack.c.h.b16 %v1491
    %v1786 = vunpack.c.l.b16 %v1492
    %v1787 = vunpack.c.h.b16 %v1492
    %v1788 = vunpack.c.l.b16 %v1493
    %v1789 = vunpack.c.h.b16 %v1493
    %v1790 = vunpack.c.l.b16 %v1494
    %v1791 = vunpack.c.h.b16 %v1494
    %v1792 = vunpack.c.l.b16 %v1495
    %v1793 = vunpack.c.h.b16 %v1495
    %v1794 = vunpack.c.l.b16 %v1496
    %v1795 = vunpack.c.h.b16 %v1496
    %v1796 = vunpack.c.l.b16 %v1497
    %v1797 = vunpack.c.h.b16 %v1497
    %v1798 = vunpack.c.l.b16 %v1498
    %v1799 = vunpack.c.h.b16 %v1498
    %v1800 = vunpack.c.l.b16 %v1499
    %v1801 = vunpack.c.h.b16 %v1499
    %v1802 = vunpack.c.l.b16 %v1500
    %v1803 = vunpack.c.h.b16 %v1500
    %v1804 = vunpack.c.l.b16 %v1501
    %v1805 = vunpack.c.h.b16 %v1501
    %v1806 = vunpack.c.l.b16 %v1502
    %v1807 = vunpack.c.h.b16 %v1502
    %v1808 = vunpack.c.l.b16 %v1503
    %v1809 = vunpack.c.h.b16 %v1503
    %v1810 = vunpack.c.l.b16 %v1504
    %v1811 = vunpack.c.h.b16 %v1504
    %v1812 = vunpack.c.l.b16 %v1505
    %v1813 = vunpack.c.h.b16 %v1505
    %v1814 = vunpack.c.l.b16 %v1506
    %v1815 = vunpack.c.h.b16 %v1506
    %v1816 = vunpack.c.l.b16 %v1507
    %v1817 = vunpack.c.h.b16 %v1507
    %v1818 = vunpack.c.l.b16 %v1508
    %v1819 = vunpack.c.h.b16 %v1508
    %v1820 = vunpack.c.l.b16 %v1509
    %v1821 = vunpack.c.h.b16 %v1509
    %v1822 = vunpack.c.l.b16 %v1510
    %v1823 = vunpack.c.h.b16 %v1510
    %v1824 = vunpack.c.l.b16 %v1511
    %v1825 = vunpack.c.h.b16 %v1511
    %v1826 = vunpack.c.l.b16 %v1512
    %v1827 = vunpack.c.h.b16 %v1512
    %v1828 = vunpack.c.l.b16 %v1513
    %v1829 = vunpack.c.h.b16 %v1513
    %v1830 = vunpack.c.l.b16 %v1514
    %v1831 = vunpack.c.h.b16 %v1514
    %v1832 = vunpack.c.l.b16 %v1515
    %v1833 = vunpack.c.h.b16 %v1515
    %v1834 = vunpack.c.l.b16 %v1516
    %v1835 = vunpack.c.h.b16 %v1516
    %v1836 = vunpack.c.l.b16 %v1517
    %v1837 = vunpack.c.h.b16 %v1517
    %v1838 = vunpack.c.l.b16 %v1518
    %v1839 = vunpack.c.h.b16 %v1518
    %v1840 = vunpack.c.l.b16 %v1519
    %v1841 = vunpack.c.h.b16 %v1519
    %v1842 = vunpack.c.l.b16 %v1520
    %v1843 = vunpack.c.h.b16 %v1520
    %v1844 = vunpack.c.l.b16 %v1521
    %v1845 = vunpack.c.h.b16 %v1521
    %v1846 = vunpack.c.l.b16 %v1522
    %v1847 = vunpack.c.h.b16 %v1522
    %v1848 = vunpack.c.l.b16 %v1523
    %v1849 = vunpack.c.h.b16 %v1523
    %v1850 = vunpack.c.l.b16 %v1524
    %v1851 = vunpack.c.h.b16 %v1524
    %v1852 = vunpack.c.l.b16 %v1525
    %v1853 = vunpack.c.h.b16 %v1525
    %v1854 = vunpack.c.l.b16 %v1526
    %v1855 = vunpack.c.h.b16 %v1526
    %v1856 = vunpack.c.l.b16 %v1527
    %v1857 = vunpack.c.h.b16 %v1527
    %v1858 = vunpack.c.l.b16 %v1528
    %v1859 = vunpack.c.h.b16 %v1528
    %v1860 = vunpack.c.l.b16 %v1529
    %v1861 = vunpack.c.h.b16 %v1529
    %v1862 = vunpack.c.l.b16 %v1530
    %v1863 = vunpack.c.h.b16 %v1530
    %v1864 = vunpack.c.l.b16 %v1531
    %v1865 = vunpack.c.h.b16 %v1531
    %v1866 = vunpack.c.l.b16 %v1532
    %v1867 = vunpack.c.h.b16 %v1532
    %v1868 = vunpack.c.l.b16 %v1533
    %v1869 = vunpack.c.h.b16 %v1533
    %v1870 = vunpack.c.l.b16 %v1534
    %v1871 = vunpack.c.h.b16 %v1534
    %v1872 = vunpack.c.l.b16 %v1535
    %v1873 = vunpack.c.h.b16 %v1535
    %v1874 = vunpack.c.l.b16 %v1536
    %v1875 = vunpack.c.h.b16 %v1536
    %v1876 = vunpack.c.l.b16 %v1537
    %v1877 = vunpack.c.h.b16 %v1537
    %v1878 = vunpack.c.l.b16 %v1538
    %v1879 = vunpack.c.h.b16 %v1538
    %v1880 = vunpack.c.l.b16 %v1539
    %v1881 = vunpack.c.h.b16 %v1539
    %v1882 = vunpack.c.l.b16 %v1540
    %v1883 = vunpack.c.h.b16 %v1540
    %v1884 = vunpack.c.l.b16 %v1541
    %v1885 = vunpack.c.h.b16 %v1541
    %v1886 = vunpack.c.l.b16 %v1542
    %v1887 = vunpack.c.h.b16 %v1542
    %v1888 = vunpack.c.l.b16 %v1543
    %v1889 = vunpack.c.h.b16 %v1543
    %v1890 = vunpack.c.l.b16 %v1544
    %v1891 = vunpack.c.h.b16 %v1544
    %v1892 = vunpack.c.l.b16 %v1545
    %v1893 = vunpack.c.h.b16 %v1545
    %v1894 = vunpack.c.l.b16 %v1546
    %v1895 = vunpack.c.h.b16 %v1546
    %v1896 = vunpack.c.l.b16 %v1547
    %v1897 = vunpack.c.h.b16 %v1547
    %v1898 = vunpack.c.l.b16 %v1548
    %v1899 = vunpack.c.h.b16 %v1548
    %v1900 = vunpack.c.l.b16 %v1549
    %v1901 = vunpack.c.h.b16 %v1549
    %v1902 = vunpack.c.l.b16 %v1550
    %v1903 = vunpack.c.h.b16 %v1550
    %v1904 = vunpack.c.l.b16 %v1551
    %v1905 = vunpack.c.h.b16 %v1551
    %v1906 = vunpack.c.l.b16 %v1552
    %v1907 = vunpack.c.h.b16 %v1552
    %v1908 = vunpack.c.l.b16 %v1553
    %v1909 = vunpack.c.h.b16 %v1553
    %v1910 = vunpack.c.l.b16 %v1554
    %v1911 = vunpack.c.h.b16 %v1554
    %v1912 = vunpack.c.l.b16 %v1555
    %v1913 = vunpack.c.h.b16 %v1555
    %v1914 = vunpack.c.l.b16 %v1556
    %v1915 = vunpack.c.h.b16 %v1556
    %v1916 = vunpack.c.l.b16 %v1557
    %v1917 = vunpack.c.h.b16 %v1557
    %v1918 = vunpack.c.l.b16 %v1558
    %v1919 = vunpack.c.h.b16 %v1558
    %v1920 = vunpack.c.l.b16 %v1559
    %v1921 = vunpack.c.h.b16 %v1559
    %v1922 = vunpack.c.l.b16 %v1560
    %v1923 = vunpack.c.h.b16 %v1560
    %v1924 = vunpack.c.l.b16 %v1561
    %v1925 = vunpack.c.h.b16 %v1561
    %v1926 = vunpack.c.l.b16 %v1562
    %v1927 = vunpack.c.h.b16 %v1562
    %v1928 = vunpack.c.l.b16 %v1563
    %v1929 = vunpack.c.h.b16 %v1563
    %v1930 = vunpack.c.l.b16 %v1564
    %v1931 = vunpack.c.h.b16 %v1564
    %v1932 = vunpack.c.l.b16 %v1565
    %v1933 = vunpack.c.h.b16 %v1565
    %v1934 = vunpack.c.l.b16 %v1566
    %v1935 = vunpack.c.h.b16 %v1566
    %v1936 = vunpack.c.l.b16 %v1567
    %v1937 = vunpack.c.h.b16 %v1567
    %v1938 = vunpack.c.l.b16 %v1568
    %v1939 = vunpack.c.h.b16 %v1568
    %v1940 = vunpack.c.l.b16 %v1569
    %v1941 = vunpack.c.h.b16 %v1569
    %v1942 = vunpack.c.l.b16 %v1570
    %v1943 = vunpack.c.h.b16 %v1570
    %v1944 = vunpack.c.l.b16 %v1571
    %v1945 = vunpack.c.h.b16 %v1571
    %v1946 = vunpack.c.l.b16 %v1572
    %v1947 = vunpack.c.h.b16 %v1572
    %v1948 = vunpack.c.l.b16 %v1573
    %v1949 = vunpack.c.h.b16 %v1573
    %v1950 = vunpack.c.l.b16 %v1574
    %v1951 = vunpack.c.h.b16 %v1574
    %v1952 = vunpack.c.l.b16 %v1575
    %v1953 = vunpack.c.h.b16 %v1575
    %v1954 = vunpack.c.l.b16 %v1576
    %v1955 = vunpack.c.h.b16 %v1576
    %v1956 = vunpack.c.l.b16 %v1577
    %v1957 = vunpack.c.h.b16 %v1577
    %v1958 = vunpack.c.l.b16 %v1578
    %v1959 = vunpack.c.h.b16 %v1578
    %v1960 = vunpack.c.l.b16 %v1579
    %v1961 = vunpack.c.h.b16 %v1579
    %v1962 = vunpack.c.l.b16 %v1580
    %v1963 = vunpack.c.h.b16 %v1580
    %v1964 = vunpack.c.l.b16 %v1581
    %v1965 = vunpack.c.h.b16 %v1581
    %v1966 = vunpack.c.l.b16 %v1582
    %v1967 = vunpack.c.h.b16 %v1582
    %v1968 = vunpack.c.l.b16 %v1583
    %v1969 = vunpack.c.h.b16 %v1583
    %v1970 = vunpack.c.l.b16 %v1584
    %v1971 = vunpack.c.h.b16 %v1584
    %v1972 = vunpack.c.l.b16 %v1585
    %v1973 = vunpack.c.h.b16 %v1585
    %v1974 = vunpack.c.l.b16 %v1586
    %v1975 = vunpack.c.h.b16 %v1586
    %v1976 = vunpack.c.l.b16 %v1587
    %v1977 = vunpack.c.h.b16 %v1587
    %v1978 = vunpack.c.l.b16 %v1588
    %v1979 = vunpack.c.h.b16 %v1588
    %v1980 = vunpack.c.l.b16 %v1589
    %v1981 = vunpack.c.h.b16 %v1589
    %v1982 = vunpack.c.l.b16 %v1590
    %v1983 = vunpack.c.h.b16 %v1590
    %v1984 = vunpack.c.l.b16 %v1591
    %v1985 = vunpack.c.h.b16 %v1591
    %v1986 = vunpack.c.l.b16 %v1592
    %v1987 = vunpack.c.h.b16 %v1592
    %v1988 = vunpack.c.l.b16 %v1593
    %v1989 = vunpack.c.h.b16 %v1593
    %v1990 = vunpack.c.l.b16 %v1594
    %v1991 = vunpack.c.h.b16 %v1594
    %v1992 = vunpack.c.l.b16 %v1595
    %v1993 = vunpack.c.h.b16 %v1595
    %v1994 = vunpack.c.l.b16 %v1596
    %v1995 = vunpack.c.h.b16 %v1596
    %v1996 = vunpack.c.l.b16 %v1597
    %v1997 = vunpack.c.h.b16 %v1597
    %v1998 = vunpack.c.l.b16 %v1598
    %v1999 = vunpack.c.h.b16 %v1598
    %v2000 = vunpack.c.l.b16 %v1599
    %v2001 = vunpack.c.h.b16 %v1599
    %v2002 = vunpack.c.l.b16 %v1600
    %v2003 = vunpack.c.h.b16 %v1600
    %v2004 = vunpack.c.l.b16 %v1601
    %v2005 = vunpack.c.h.b16 %v1601
    %v2006 = vunpack.c.l.b16 %v1602
    %v2007 = vunpack.c.h.b16 %v1602
    %v2008 = vunpack.c.l.b16 %v1603
    %v2009 = vunpack.c.h.b16 %v1603
    %v2010 = vpack.c.b16 %v1758, %v1754
    %v2011 = vpack.c.b16 %v1759, %v1755
    %v2012 = vpack.c.b16 %v1760, %v1756
    %v2013 = vpack.c.b16 %v1761, %v1757
    %v2014 = vpack.c.b16 %v1766, %v1762
    %v2015 = vpack.c.b16 %v1767, %v1763
    %v2016 = vpack.c.b16 %v1768, %v1764
    %v2017 = vpack.c.b16 %v1769, %v1765
    %v2018 = vpack.c.b16 %v1774, %v1770
    %v2019 = vpack.c.b16 %v1775, %v1771
    %v2020 = vpack.c.b16 %v1776, %v1772
    %v2021 = vpack.c.b16 %v1777, %v1773
    %v2022 = vpack.c.b16 %v1782, %v1778
    %v2023 = vpack.c.b16 %v1783, %v1779
    %v2024 = vpack.c.b16 %v1784, %v1780
    %v2025 = vpack.c.b16 %v1785, %v1781
    %v2026 = vpack.c.b16 %v1790, %v1786
    %v2027 = vpack.c.b16 %v1791, %v1787
    %v2028 = vpack.c.b16 %v1792, %v1788
    %v2029 = vpack.c.b16 %v1793, %v1789
    %v2030 = vpack.c.b16 %v1798, %v1794
    %v2031 = vpack.c.b16 %v1799, %v1795
    %v2032 = vpack.c.b16 %v1800, %v1796
    %v2033 = vpack.c.b16 %v1801, %v1797
    %v2034 = vpack.c.b16 %v1806, %v1802
    %v2035 = vpack.c.b16 %v1807, %v1803
    %v2036 = vpack.c.b16 %v1808, %v1804
    %v2037 = vpack.c.b16 %v1809, %v1805
    %v2038 = vpack.c.b16 %v1814, %v1810
    %v2039 = vpack.c.b16 %v1815, %v1811
    %v2040 = vpack.c.b16 %v1816, %v1812
    %v2041 = vpack.c.b16 %v1817, %v1813
    %v2042 = vpack.c.b16 %v1822, %v1818
    %v2043 = vpack.c.b16 %v1823, %v1819
    %v2044 = vpack.c.b16 %v1824, %v1820
    %v2045 = vpack.c.b16 %v1825, %v1821
    %v2046 = vpack.c.b16 %v1830, %v1826
    %v2047 = vpack.c.b16 %v1831, %v1827
    %v2048 = vpack.c.b16 %v1832, %v1828
    %v2049 = vpack.c.b16 %v1833, %v1829
    %v2050 = vpack.c.b16 %v1838, %v1834
    %v2051 = vpack.c.b16 %v1839, %v1835
    %v2052 = vpack.c.b16 %v1840, %v1836
    %v2053 = vpack.c.b16 %v1841, %v1837
    %v2054 = vpack.c.b16 %v1846, %v1842
    %v2055 = vpack.c.b16 %v1847, %v1843
    %v2056 = vpack.c.b16 %v1848, %v1844
    %v2057 = vpack.c.b16 %v1849, %v1845
    %v2058 = vpack.c.b16 %v1854, %v1850
    %v2059 = vpack.c.b16 %v1855, %v1851
    %v2060 = vpack.c.b16 %v1856, %v1852
    %v2061 = vpack.c.b16 %v1857, %v1853
    %v2062 = vpack.c.b16 %v1862, %v1858
    %v2063 = vpack.c.b16 %v1863, %v1859
    %v2064 = vpack.c.b16 %v1864, %v1860
    %v2065 = vpack.c.b16 %v1865, %v1861
    %v2066 = vpack.c.b16 %v1870, %v1866
    %v2067 = vpack.c.b16 %v1871, %v1867
    %v2068 = vpack.c.b16 %v1872, %v1868
    %v2069 = vpack.c.b16 %v1873, %v1869
    %v2070 = vpack.c.b16 %v1878, %v1874
    %v2071 = vpack.c.b16 %v1879, %v1875
    %v2072 = vpack.c.b16 %v1880, %v1876
    %v2073 = vpack.c.b16 %v1881, %v1877
    %v2074 = vpack.c.b16 %v1886, %v1882
    %v2075 = vpack.c.b16 %v1887, %v1883
    %v2076 = vpack.c.b16 %v1888, %v1884
    %v2077 = vpack.c.b16 %v1889, %v1885
    %v2078 = vpack.c.b16 %v1894, %v1890
    %v2079 = vpack.c.b16 %v1895, %v1891
    %v2080 = vpack.c.b16 %v1896, %v1892
    %v2081 = vpack.c.b16 %v1897, %v1893
    %v2082 = vpack.c.b16 %v1902, %v1898
    %v2083 = vpack.c.b16 %v1903, %v1899
    %v2084 = vpack.c.b16 %v1904, %v1900
    %v2085 = vpack.c.b16 %v1905, %v1901
    %v2086 = vpack.c.b16 %v1910, %v1906
    %v2087 = vpack.c.b16 %v1911, %v1907
    %v2088 = vpack.c.b16 %v1912, %v1908
    %v2089 = vpack.c.b16 %v1913, %v1909
    %v2090 = vpack.c.b16 %v1918, %v1914
    %v2091 = vpack.c.b16 %v1919, %v1915
    %v2092 = vpack.c.b16 %v1920, %v1916
    %v2093 = vpack.c.b16 %v1921, %v1917
    %v2094 = vpack.c.b16 %v1926, %v1922
    %v2095 = vpack.c.b16 %v1927, %v1923
    %v2096 = vpack.c.b16 %v1928, %v1924
    %v2097 = vpack.c.b16 %v1929, %v1925
    %v2098 = vpack.c.b16 %v1934, %v1930
    %v2099 = vpack.c.b16 %v1935, %v1931
    %v2100 = vpack.c.b16 %v1936, %v1932
    %v2101 = vpack.c.b16 %v1937, %v1933
    %v2102 = vpack.c.b16 %v1942, %v1938
    %v2103 = vpack.c.b16 %v1943, %v1939
    %v2104 = vpack.c.b16 %v1944, %v1940
    %v2105 = vpack.c.b16 %v1945, %v1941
    %v2106 = vpack.c.b16 %v1950, %v1946
    %v2107 = vpack.c.b16 %v1951, %v1947
    %v2108 = vpack.c.b16 %v1952, %v1948
    %v2109 = vpack.c.b16 %v1953, %v1949
    %v2110 = vpack.c.b16 %v1958, %v1954
    %v2111 = vpack.c.b16 %v1959, %v1955
    %v2112 = vpack.c.b16 %v1960, %v1956
    %v2113 = vpack.c.b16 %v1961, %v1957
    %v2114 = vpack.c.b16 %v1966, %v1962
    %v2115 = vpack.c.b16 %v1967, %v1963
    %v2116 = vpack.c.b16 %v1968, %v1964
    %v2117 = vpack.c.b16 %v1969, %v1965
    %v2118 = vpack.c.b16 %v1974, %v1970
    %v2119 = vpack.c.b16 %v1975, %v1971
    %v2120 = vpack.c.b16 %v1976, %v1972
    %v2121 = vpack.c.b16 %v1977, %v1973
    %v2122 = vpack.c.b16 %v1982, %v1978
    %v2123 = vpack.c.b16 %v1983, %v1979
    %v2124 = vpack.c.b16 %v1984, %v1980
    %v2125 = vpack.c.b16 %v1985, %v1981
    %v2126 = vpack.c.b16 %v1990, %v1986
    %v2127 = vpack.c.b16 %v1991, %v1987
    %v2128 = vpack.c.b16 %v1992, %v1988
    %v2129 = vpack.c.b16 %v1993, %v1989
    %v2130 = vpack.c.b16 %v1998, %v1994
    %v2131 = vpack.c.b16 %v1999, %v1995
    %v2132 = vpack.c.b16 %v2000, %v1996
    %v2133 = vpack.c.b16 %v2001, %v1997
    %v2134 = vpack.c.b16 %v2006, %v2002
    %v2135 = vpack.c.b16 %v2007, %v2003
    %v2136 = vpack.c.b16 %v2008, %v2004
    %v2137 = vpack.c.b16 %v2009, %v2005
    %2266 = vmatprep.subr.bf16.mxu0 %v2039
    %2267 = vmatpush1.bf16.msra.mxu0 %v2038
    %2268 = vmatprep.subr.bf16.mxu0 %v2035
    %2269 = vmatpush1.bf16.msra.mxu0 %v2034
    %2270 = vmatprep.subr.bf16.mxu0 %v2031
    %2271 = vmatpush1.bf16.msra.mxu0 %v2030
    %2272 = vmatprep.subr.bf16.mxu0 %v2027
    %2273 = vmatpush1.bf16.msra.mxu0 %v2026
    %2274 = vmatprep.subr.bf16.mxu0 %v2023
    %2275 = vmatpush1.bf16.msra.mxu0 %v2022
    %2276 = vmatprep.subr.bf16.mxu0 %v2019
    %2277 = vmatpush1.bf16.msra.mxu0 %v2018
    %2278 = vmatprep.subr.bf16.mxu0 %v2015
    %2279 = vmatpush1.bf16.msra.mxu0 %v2014
    %2280 = vmatprep.subr.bf16.mxu0 %v2011
    %2281 = vmatpush1.bf16.msra.mxu0 %v2010
    %2282 = vmatprep.subr.bf16.mxu0 %v2071
    %2283 = vmatpush2.bf16.msra.mxu0 %v2070
    %2284 = vmatprep.subr.bf16.mxu0 %v2067
    %2285 = vmatpush2.bf16.msra.mxu0 %v2066
    %2286 = vmatprep.subr.bf16.mxu0 %v2063
    %2287 = vmatpush2.bf16.msra.mxu0 %v2062
    %2288 = vmatprep.subr.bf16.mxu0 %v2059
    %2289 = vmatpush2.bf16.msra.mxu0 %v2058
    %2290 = vmatprep.subr.bf16.mxu0 %v2055
    %2291 = vmatpush2.bf16.msra.mxu0 %v2054
    %2292 = vmatprep.subr.bf16.mxu0 %v2051
    %2293 = vmatpush2.bf16.msra.mxu0 %v2050
    %2294 = vmatprep.subr.bf16.mxu0 %v2047
    %2295 = vmatpush2.bf16.msra.mxu0 %v2046
    %2296 = vmatprep.subr.bf16.mxu0 %v2043
    %2297 = vmatpush2.bf16.msra.mxu0 %v2042
    %2298 = vmatprep.mubr.bf16.mxu0 %v1415
    %2299 = vmatmul.mubr.bf16.gmra.mxu0 %v1411
    %v2300 = vpop.f32.mrf.mxu0
    %v2301 = vadd.f32 %v1609, %v2300
    %v2302 = vpop.f32.mrf.mxu0
    %v2303 = vadd.f32 %v1613, %v2302
    %v2304 = vpop.f32.mrf.mxu0
    %v2305 = vadd.f32 %v1609, %v2304
    %v2306 = vpop.f32.mrf.mxu0
    %v2307 = vadd.f32 %v1613, %v2306
    %2308 = vdwg.mxu0
    %2309 = vmatprep.subr.bf16.mxu0 %v2103
    %2310 = vmatpush1.bf16.msra.mxu0 %v2102
    %2311 = vmatprep.subr.bf16.mxu0 %v2099
    %2312 = vmatpush1.bf16.msra.mxu0 %v2098
    %2313 = vmatprep.subr.bf16.mxu0 %v2095
    %2314 = vmatpush1.bf16.msra.mxu0 %v2094
    %2315 = vmatprep.subr.bf16.mxu0 %v2091
    %2316 = vmatpush1.bf16.msra.mxu0 %v2090
    %2317 = vmatprep.subr.bf16.mxu0 %v2087
    %2318 = vmatpush1.bf16.msra.mxu0 %v2086
    %2319 = vmatprep.subr.bf16.mxu0 %v2083
    %2320 = vmatpush1.bf16.msra.mxu0 %v2082
    %2321 = vmatprep.subr.bf16.mxu0 %v2079
    %2322 = vmatpush1.bf16.msra.mxu0 %v2078
    %2323 = vmatprep.subr.bf16.mxu0 %v2075
    %2324 = vmatpush1.bf16.msra.mxu0 %v2074
    %2325 = vmatprep.subr.bf16.mxu0 %v2135
    %2326 = vmatpush2.bf16.msra.mxu0 %v2134
    %2327 = vmatprep.subr.bf16.mxu0 %v2131
    %2328 = vmatpush2.bf16.msra.mxu0 %v2130
    %2329 = vmatprep.subr.bf16.mxu0 %v2127
    %2330 = vmatpush2.bf16.msra.mxu0 %v2126
    %2331 = vmatprep.subr.bf16.mxu0 %v2123
    %2332 = vmatpush2.bf16.msra.mxu0 %v2122
    %2333 = vmatprep.subr.bf16.mxu0 %v2119
    %2334 = vmatpush2.bf16.msra.mxu0 %v2118
    %2335 = vmatprep.subr.bf16.mxu0 %v2115
    %2336 = vmatpush2.bf16.msra.mxu0 %v2114
    %2337 = vmatprep.subr.bf16.mxu0 %v2111
    %2338 = vmatpush2.bf16.msra.mxu0 %v2110
    %2339 = vmatprep.subr.bf16.mxu0 %v2107
    %2340 = vmatpush2.bf16.msra.mxu0 %v2106
    %2341 = vmatprep.mubr.bf16.mxu0 %v1474
    %2342 = vmatmul.mubr.bf16.gmra.mxu0 %v1470
    %v2343 = vpop.f32.mrf.mxu0
    %v2344 = vadd.f32 %v2301, %v2343
    %v2345 = vpop.f32.mrf.mxu0
    %v2346 = vadd.f32 %v2303, %v2345
    %v2347 = vpop.f32.mrf.mxu0
    %v2348 = vadd.f32 %v2305, %v2347
    %v2349 = vpop.f32.mrf.mxu0
    %v2350 = vadd.f32 %v2307, %v2349
    %2351 = vdwg.mxu0
    %2352 = vmatprep.subr.bf16.mxu0 %v2041
    %2353 = vmatpush1.bf16.msra.mxu0 %v2040
    %2354 = vmatprep.subr.bf16.mxu0 %v2037
    %2355 = vmatpush1.bf16.msra.mxu0 %v2036
    %2356 = vmatprep.subr.bf16.mxu0 %v2033
    %2357 = vmatpush1.bf16.msra.mxu0 %v2032
    %2358 = vmatprep.subr.bf16.mxu0 %v2029
    %2359 = vmatpush1.bf16.msra.mxu0 %v2028
    %2360 = vmatprep.subr.bf16.mxu0 %v2025
    %2361 = vmatpush1.bf16.msra.mxu0 %v2024
    %2362 = vmatprep.subr.bf16.mxu0 %v2021
    %2363 = vmatpush1.bf16.msra.mxu0 %v2020
    %2364 = vmatprep.subr.bf16.mxu0 %v2017
    %2365 = vmatpush1.bf16.msra.mxu0 %v2016
    %2366 = vmatprep.subr.bf16.mxu0 %v2013
    %2367 = vmatpush1.bf16.msra.mxu0 %v2012
    %2368 = vmatprep.subr.bf16.mxu0 %v2073
    %2369 = vmatpush2.bf16.msra.mxu0 %v2072
    %2370 = vmatprep.subr.bf16.mxu0 %v2069
    %2371 = vmatpush2.bf16.msra.mxu0 %v2068
    %2372 = vmatprep.subr.bf16.mxu0 %v2065
    %2373 = vmatpush2.bf16.msra.mxu0 %v2064
    %2374 = vmatprep.subr.bf16.mxu0 %v2061
    %2375 = vmatpush2.bf16.msra.mxu0 %v2060
    %2376 = vmatprep.subr.bf16.mxu0 %v2057
    %2377 = vmatpush2.bf16.msra.mxu0 %v2056
    %2378 = vmatprep.subr.bf16.mxu0 %v2053
    %2379 = vmatpush2.bf16.msra.mxu0 %v2052
    %2380 = vmatprep.subr.bf16.mxu0 %v2049
    %2381 = vmatpush2.bf16.msra.mxu0 %v2048
    %2382 = vmatprep.subr.bf16.mxu0 %v2045
    %2383 = vmatpush2.bf16.msra.mxu0 %v2044
    %2384 = vmatprep.mubr.bf16.mxu0 %v1415
    %2385 = vmatmul.mubr.bf16.gmra.mxu0 %v1411
    %v2386 = vpop.f32.mrf.mxu0
    %v2387 = vadd.f32 %v1617, %v2386
    %v2388 = vpop.f32.mrf.mxu0
    %v2389 = vadd.f32 %v1621, %v2388
    %v2390 = vpop.f32.mrf.mxu0
    %v2391 = vadd.f32 %v1617, %v2390
    %v2392 = vpop.f32.mrf.mxu0
    %v2393 = vadd.f32 %v1621, %v2392
    %2394 = vdwg.mxu0
    %2395 = vmatprep.subr.bf16.mxu0 %v2105
    %2396 = vmatpush1.bf16.msra.mxu0 %v2104
    %2397 = vmatprep.subr.bf16.mxu0 %v2101
    %2398 = vmatpush1.bf16.msra.mxu0 %v2100
    %2399 = vmatprep.subr.bf16.mxu0 %v2097
    %2400 = vmatpush1.bf16.msra.mxu0 %v2096
    %2401 = vmatprep.subr.bf16.mxu0 %v2093
    %2402 = vmatpush1.bf16.msra.mxu0 %v2092
    %2403 = vmatprep.subr.bf16.mxu0 %v2089
    %2404 = vmatpush1.bf16.msra.mxu0 %v2088
    %2405 = vmatprep.subr.bf16.mxu0 %v2085
    %2406 = vmatpush1.bf16.msra.mxu0 %v2084
    %2407 = vmatprep.subr.bf16.mxu0 %v2081
    %2408 = vmatpush1.bf16.msra.mxu0 %v2080
    %2409 = vmatprep.subr.bf16.mxu0 %v2077
    %2410 = vmatpush1.bf16.msra.mxu0 %v2076
    %2411 = vmatprep.subr.bf16.mxu0 %v2137
    %2412 = vmatpush2.bf16.msra.mxu0 %v2136
    %2413 = vmatprep.subr.bf16.mxu0 %v2133
    %2414 = vmatpush2.bf16.msra.mxu0 %v2132
    %2415 = vmatprep.subr.bf16.mxu0 %v2129
    %2416 = vmatpush2.bf16.msra.mxu0 %v2128
    %2417 = vmatprep.subr.bf16.mxu0 %v2125
    %2418 = vmatpush2.bf16.msra.mxu0 %v2124
    %2419 = vmatprep.subr.bf16.mxu0 %v2121
    %2420 = vmatpush2.bf16.msra.mxu0 %v2120
    %2421 = vmatprep.subr.bf16.mxu0 %v2117
    %2422 = vmatpush2.bf16.msra.mxu0 %v2116
    %2423 = vmatprep.subr.bf16.mxu0 %v2113
    %2424 = vmatpush2.bf16.msra.mxu0 %v2112
    %2425 = vmatprep.subr.bf16.mxu0 %v2109
    %2426 = vmatpush2.bf16.msra.mxu0 %v2108
    %2427 = vmatprep.mubr.bf16.mxu0 %v1474
    %2428 = vmatmul.mubr.bf16.gmra.mxu0 %v1470
    %v2429 = vpop.f32.mrf.mxu0
    %v2430 = vadd.f32 %v2387, %v2429
    %v2431 = vpop.f32.mrf.mxu0
    %v2432 = vadd.f32 %v2389, %v2431
    %v2433 = vpop.f32.mrf.mxu0
    %v2434 = vadd.f32 %v2391, %v2433
    %v2435 = vpop.f32.mrf.mxu0
    %v2436 = vadd.f32 %v2393, %v2435
    %2437 = vdwg.mxu0
    %v2438 = vadd.f32 %v2344, %v2348
    %v2439 = vrot.slane %v2438, 4
    %v2440 = vadd.f32 %v2438, %v2439
    %v2441 = vrot.slane %v2440, 2
    %v2442 = vadd.f32 %v2440, %v2441
    %v2443 = vrot.slane %v2442, 1
    %v2444 = vadd.f32 %v2442, %v2443
    %v2445 = vadd.f32 %v2346, %v2350
    %v2446 = vrot.slane %v2445, 4
    %v2447 = vadd.f32 %v2445, %v2446
    %v2448 = vrot.slane %v2447, 2
    %v2449 = vadd.f32 %v2447, %v2448
    %v2450 = vrot.slane %v2449, 1
    %v2451 = vadd.f32 %v2449, %v2450
    %v2452 = vadd.f32 %v2430, %v2434
    %v2453 = vrot.slane %v2452, 4
    %v2454 = vadd.f32 %v2452, %v2453
    %v2455 = vrot.slane %v2454, 2
    %v2456 = vadd.f32 %v2454, %v2455
    %v2457 = vrot.slane %v2456, 1
    %v2458 = vadd.f32 %v2456, %v2457
    %v2459 = vadd.f32 %v2432, %v2436
    %v2460 = vrot.slane %v2459, 4
    %v2461 = vadd.f32 %v2459, %v2460
    %v2462 = vrot.slane %v2461, 2
    %v2463 = vadd.f32 %v2461, %v2462
    %v2464 = vrot.slane %v2463, 1
    %v2465 = vadd.f32 %v2463, %v2464
    %v2466 = vadd.f32 %v2444, %v2458
    %v2467 = vadd.f32 %v2451, %v2465
    %v2468 = vmul.f32 %v2344, %v2344
    %v2469 = vmul.f32 %v2346, %v2346
    %v2470 = vmul.f32 %v2348, %v2348
    %v2471 = vmul.f32 %v2350, %v2350
    %v2472 = vadd.f32 %v2468, %v2470
    %v2473 = vrot.slane %v2472, 4
    %v2474 = vadd.f32 %v2472, %v2473
    %v2475 = vrot.slane %v2474, 2
    %v2476 = vadd.f32 %v2474, %v2475
    %v2477 = vrot.slane %v2476, 1
    %v2478 = vadd.f32 %v2476, %v2477
    %v2479 = vadd.f32 %v2469, %v2471
    %v2480 = vrot.slane %v2479, 4
    %v2481 = vadd.f32 %v2479, %v2480
    %v2482 = vrot.slane %v2481, 2
    %v2483 = vadd.f32 %v2481, %v2482
    %v2484 = vrot.slane %v2483, 1
    %v2485 = vadd.f32 %v2483, %v2484
    %v2486 = vmul.f32 %v2430, %v2430
    %v2487 = vmul.f32 %v2432, %v2432
    %v2488 = vmul.f32 %v2434, %v2434
    %v2489 = vmul.f32 %v2436, %v2436
    %v2490 = vadd.f32 %v2486, %v2488
    %v2491 = vrot.slane %v2490, 4
    %v2492 = vadd.f32 %v2490, %v2491
    %v2493 = vrot.slane %v2492, 2
    %v2494 = vadd.f32 %v2492, %v2493
    %v2495 = vrot.slane %v2494, 1
    %v2496 = vadd.f32 %v2494, %v2495
    %v2497 = vadd.f32 %v2487, %v2489
    %v2498 = vrot.slane %v2497, 4
    %v2499 = vadd.f32 %v2497, %v2498
    %v2500 = vrot.slane %v2499, 2
    %v2501 = vadd.f32 %v2499, %v2500
    %v2502 = vrot.slane %v2501, 1
    %v2503 = vadd.f32 %v2501, %v2502
    %v2504 = vadd.f32 %v2478, %v2496
    %v2505 = vadd.f32 %v2485, %v2503
    %v2506 = vsel %vm1176, %v2466, %v2504
    %v2507 = vsel %vm1176, %v2467, %v2505
    %v2508 = vld [vmem:[#allocation7] sm:$0xff]
    %v2509 = vld [vmem:[#allocation7 + $0x8] sm:$0xff]
    %v2510 = vld [vmem:[#allocation7 + $0x10] sm:$0xff]
    %v2511 = vld [vmem:[#allocation7 + $0x18] sm:$0xff]
    %v2512 = vld [vmem:[#allocation7 + $0x20] sm:$0xff]
    %v2513 = vld [vmem:[#allocation7 + $0x28] sm:$0xff]
    %v2514 = vld [vmem:[#allocation7 + $0x30] sm:$0xff]
    %v2515 = vld [vmem:[#allocation7 + $0x38] sm:$0xff]
    %v2516 = vld [vmem:[#allocation7 + $0x40] sm:$0xff]
    %v2517 = vld [vmem:[#allocation7 + $0x48] sm:$0xff]
    %v2518 = vld [vmem:[#allocation7 + $0x50] sm:$0xff]
    %v2519 = vld [vmem:[#allocation7 + $0x58] sm:$0xff]
    %v2520 = vld [vmem:[#allocation7 + $0x60] sm:$0xff]
    %v2521 = vld [vmem:[#allocation7 + $0x68] sm:$0xff]
    %v2522 = vld [vmem:[#allocation7 + $0x70] sm:$0xff]
    %v2523 = vld [vmem:[#allocation7 + $0x78] sm:$0xff]
    %v2524 = vld [vmem:[#allocation7 + $0x80] sm:$0xff]
    %v2525 = vld [vmem:[#allocation7 + $0x88] sm:$0xff]
    %v2526 = vld [vmem:[#allocation7 + $0x90] sm:$0xff]
    %v2527 = vld [vmem:[#allocation7 + $0x98] sm:$0xff]
    %v2528 = vld [vmem:[#allocation7 + $0xa0] sm:$0xff]
    %v2529 = vld [vmem:[#allocation7 + $0xa8] sm:$0xff]
    %v2530 = vld [vmem:[#allocation7 + $0xb0] sm:$0xff]
    %v2531 = vld [vmem:[#allocation7 + $0xb8] sm:$0xff]
    %v2532 = vld [vmem:[#allocation7 + $0xc0] sm:$0xff]
    %v2533 = vld [vmem:[#allocation7 + $0xc8] sm:$0xff]
    %v2534 = vld [vmem:[#allocation7 + $0xd0] sm:$0xff]
    %v2535 = vld [vmem:[#allocation7 + $0xd8] sm:$0xff]
    %v2536 = vld [vmem:[#allocation7 + $0xe0] sm:$0xff]
    %v2537 = vld [vmem:[#allocation7 + $0xe8] sm:$0xff]
    %v2538 = vld [vmem:[#allocation7 + $0xf0] sm:$0xff]
    %v2539 = vld [vmem:[#allocation7 + $0xf8] sm:$0xff]
    %v2540 = vld [vmem:[#allocation7 + $0x100] sm:$0xff]
    %v2541 = vld [vmem:[#allocation7 + $0x108] sm:$0xff]
    %v2542 = vld [vmem:[#allocation7 + $0x110] sm:$0xff]
    %v2543 = vld [vmem:[#allocation7 + $0x118] sm:$0xff]
    %v2544 = vld [vmem:[#allocation7 + $0x120] sm:$0xff]
    %v2545 = vld [vmem:[#allocation7 + $0x128] sm:$0xff]
    %v2546 = vld [vmem:[#allocation7 + $0x130] sm:$0xff]
    %v2547 = vld [vmem:[#allocation7 + $0x138] sm:$0xff]
    %v2548 = vld [vmem:[#allocation7 + $0x140] sm:$0xff]
    %v2549 = vld [vmem:[#allocation7 + $0x148] sm:$0xff]
    %v2550 = vld [vmem:[#allocation7 + $0x150] sm:$0xff]
    %v2551 = vld [vmem:[#allocation7 + $0x158] sm:$0xff]
    %v2552 = vld [vmem:[#allocation7 + $0x160] sm:$0xff]
    %v2553 = vld [vmem:[#allocation7 + $0x168] sm:$0xff]
    %v2554 = vld [vmem:[#allocation7 + $0x170] sm:$0xff]
    %v2555 = vld [vmem:[#allocation7 + $0x178] sm:$0xff]
    %v2556 = vld [vmem:[#allocation7 + $0x180] sm:$0xff]
    %v2557 = vld [vmem:[#allocation7 + $0x188] sm:$0xff]
    %v2558 = vld [vmem:[#allocation7 + $0x190] sm:$0xff]
    %v2559 = vld [vmem:[#allocation7 + $0x198] sm:$0xff]
    %v2560 = vld [vmem:[#allocation7 + $0x1a0] sm:$0xff]
    %v2561 = vld [vmem:[#allocation7 + $0x1a8] sm:$0xff]
    %v2562 = vld [vmem:[#allocation7 + $0x1b0] sm:$0xff]
    %v2563 = vld [vmem:[#allocation7 + $0x1b8] sm:$0xff]
    %v2564 = vld [vmem:[#allocation7 + $0x1c0] sm:$0xff]
    %v2565 = vld [vmem:[#allocation7 + $0x1c8] sm:$0xff]
    %v2566 = vld [vmem:[#allocation7 + $0x1d0] sm:$0xff]
    %v2567 = vld [vmem:[#allocation7 + $0x1d8] sm:$0xff]
    %v2568 = vld [vmem:[#allocation7 + $0x1e0] sm:$0xff]
    %v2569 = vld [vmem:[#allocation7 + $0x1e8] sm:$0xff]
    %v2570 = vld [vmem:[#allocation7 + $0x1f0] sm:$0xff]
    %v2571 = vld [vmem:[#allocation7 + $0x1f8] sm:$0xff]
    %2572 = vmatprep.subr.mxu0 %v2539
    %2573 = vmatpush1.msra.mxu0 %v2538
    %2574 = vmatprep.subr.mxu0 %v2537
    %2575 = vmatpush1.msra.mxu0 %v2536
    %2576 = vmatprep.subr.mxu0 %v2535
    %2577 = vmatpush1.msra.mxu0 %v2534
    %2578 = vmatprep.subr.mxu0 %v2533
    %2579 = vmatpush1.msra.mxu0 %v2532
    %2580 = vmatprep.subr.mxu0 %v2531
    %2581 = vmatpush1.msra.mxu0 %v2530
    %2582 = vmatprep.subr.mxu0 %v2529
    %2583 = vmatpush1.msra.mxu0 %v2528
    %2584 = vmatprep.subr.mxu0 %v2527
    %2585 = vmatpush1.msra.mxu0 %v2526
    %2586 = vmatprep.subr.mxu0 %v2525
    %2587 = vmatpush1.msra.mxu0 %v2524
    %2588 = vmatprep.subr.mxu0 %v2523
    %2589 = vmatpush1.msra.mxu0 %v2522
    %2590 = vmatprep.subr.mxu0 %v2521
    %2591 = vmatpush1.msra.mxu0 %v2520
    %2592 = vmatprep.subr.mxu0 %v2519
    %2593 = vmatpush1.msra.mxu0 %v2518
    %2594 = vmatprep.subr.mxu0 %v2517
    %2595 = vmatpush1.msra.mxu0 %v2516
    %2596 = vmatprep.subr.mxu0 %v2515
    %2597 = vmatpush1.msra.mxu0 %v2514
    %2598 = vmatprep.subr.mxu0 %v2513
    %2599 = vmatpush1.msra.mxu0 %v2512
    %2600 = vmatprep.subr.mxu0 %v2511
    %2601 = vmatpush1.msra.mxu0 %v2510
    %2602 = vmatprep.subr.mxu0 %v2509
    %2603 = vmatpush1.msra.mxu0 %v2508
    %2604 = vmatprep.subr.mxu0 %v2571
    %2605 = vmatpush2.msra.mxu0 %v2570
    %2606 = vmatprep.subr.mxu0 %v2569
    %2607 = vmatpush2.msra.mxu0 %v2568
    %2608 = vmatprep.subr.mxu0 %v2567
    %2609 = vmatpush2.msra.mxu0 %v2566
    %2610 = vmatprep.subr.mxu0 %v2565
    %2611 = vmatpush2.msra.mxu0 %v2564
    %2612 = vmatprep.subr.mxu0 %v2563
    %2613 = vmatpush2.msra.mxu0 %v2562
    %2614 = vmatprep.subr.mxu0 %v2561
    %2615 = vmatpush2.msra.mxu0 %v2560
    %2616 = vmatprep.subr.mxu0 %v2559
    %2617 = vmatpush2.msra.mxu0 %v2558
    %2618 = vmatprep.subr.mxu0 %v2557
    %2619 = vmatpush2.msra.mxu0 %v2556
    %2620 = vmatprep.subr.mxu0 %v2555
    %2621 = vmatpush2.msra.mxu0 %v2554
    %2622 = vmatprep.subr.mxu0 %v2553
    %2623 = vmatpush2.msra.mxu0 %v2552
    %2624 = vmatprep.subr.mxu0 %v2551
    %2625 = vmatpush2.msra.mxu0 %v2550
    %2626 = vmatprep.subr.mxu0 %v2549
    %2627 = vmatpush2.msra.mxu0 %v2548
    %2628 = vmatprep.subr.mxu0 %v2547
    %2629 = vmatpush2.msra.mxu0 %v2546
    %2630 = vmatprep.subr.mxu0 %v2545
    %2631 = vmatpush2.msra.mxu0 %v2544
    %2632 = vmatprep.subr.mxu0 %v2543
    %2633 = vmatpush2.msra.mxu0 %v2542
    %2634 = vmatprep.subr.mxu0 %v2541
    %2635 = vmatpush2.msra.mxu0 %v2540
    %2636 = vmatprep.mubr.f32.mxu0 %v2507
    %2637 = vmatmul.mubr.f32.gmra.mxu0 %v2506
    %v2638 = vpop.f32.mrf.mxu0
    %v2639 = vadd.f32 0.0, %v2638
    %v2640 = vpop.f32.mrf.mxu0
    %v2641 = vadd.f32 0.0, %v2640
    %2642 = vdwg.mxu0
    %v2643 = vmul.f32 %v2639, %v2639
    %v2644 = vmul.f32 %v2641, %v2641
    %v2647 = vrot.slane %v2643, 7
    %v2648 = vrot.slane %v2644, 7
    %v2651 = vsub.f32 %v2639, %v2647
    %v2652 = vsub.f32 %v2641, %v2648
    %v2653 = vadd.f32 %v2651, 1e-05
    %v2654 = vadd.f32 %v2652, 1e-05
    %v2655 = vrsqrt.pop %v2653
    %v2656 = vrsqrt.pop %v2654
    %v2657 = vld [vmem:[%s10] sm:$0x3]
    %v2659 = vlaneseq
    %v2660 = vshrl.u32 %v2659, 7
    %v2661 = vsub.s32 0, %v2660
    %v2662 = vrot.slane %v2657, %v2661
    %v2663 = vlaneseq
    %v2664 = vshrl.u32 %v2663, 7
    %v2665 = vsub.s32 1, %v2664
    %v2666 = vrot.slane %v2657, %v2665
    %v2669 = vmul.f32 %v2655, %v2662
    %v2670 = vmul.f32 %v2656, %v2666
    %v2671 = vld [vmem:[%s11] sm:$0x3]
    %v2674 = vrot.slane %v2669, 1
    %v2675 = vrot.slane %v2670, 1
    %v2678 = vmul.f32 %v2639, %v2674
    %v2679 = vmul.f32 %v2641, %v2675
    %v2682 = vcombine.low %v2678, %v2679
    %v2684 = vunpack.c.l.s4 1966171168
    %v2685 = vunpack.c.0.s8 %v2684
    %v2686 = vlaneseq
    %v2687 = vshrl.u32 %v2686, 7
    %v2688 = vsub.s32 %v2685, %v2687
    %v2689 = vrot.slane %v2682, %v2688
    %v2691 = vunpack.c.l.s4 1966171168
    %v2692 = vunpack.c.0.s8 %v2691
    %v2693 = vlaneseq
    %v2694 = vshrl.u32 %v2693, 7
    %v2695 = vsub.s32 %v2692, %v2694
    %v2696 = vrot.slane %v2689, %v2695
    %v2698 = vsub.f32 %v2671, %v2696
    %v2699 = vlaneseq
    %v2700 = vshrl.u32 %v2699, 7
    %v2701 = vsub.s32 1, %v2700
    %v2702 = vrot.slane %v2669, %v2701
    %v2703 = vlaneseq
    %v2704 = vshrl.u32 %v2703, 7
    %v2705 = vsub.s32 1, %v2704
    %v2706 = vrot.slane %v2670, %v2705
    %v2707 = vmul.f32 %v2344, %v2702
    %v2708 = vmul.f32 %v2346, %v2706
    %v2709 = vmul.f32 %v2348, %v2702
    %v2710 = vmul.f32 %v2350, %v2706
    %v2712 = vlaneseq
    %v2713 = vshrl.u32 %v2712, 7
    %v2714 = vsub.s32 0, %v2713
    %v2715 = vrot.slane %v2698, %v2714
    %v2716 = vlaneseq
    %v2717 = vshrl.u32 %v2716, 7
    %v2718 = vsub.s32 1, %v2717
    %v2719 = vrot.slane %v2698, %v2718
    %v2722 = vadd.f32 %v2707, %v2715
    %v2723 = vadd.f32 %v2708, %v2719
    %v2724 = vadd.f32 %v2709, %v2715
    %v2725 = vadd.f32 %v2710, %v2719
    %v2726 = vmax.f32 %v2722, 0.0
    %v2727 = vmax.f32 %v2723, 0.0
    %v2728 = vmax.f32 %v2724, 0.0
    %v2729 = vmax.f32 %v2725, 0.0
    %v2730 = vpack.c.bf16 %v2728, %v2726
    %v2731 = vpack.c.bf16 %v2729, %v2727
    %v2732 = vmul.f32 %v2430, %v2702
    %v2733 = vmul.f32 %v2432, %v2706
    %v2734 = vmul.f32 %v2434, %v2702
    %v2735 = vmul.f32 %v2436, %v2706
    %v2736 = vadd.f32 %v2732, %v2715
    %v2737 = vadd.f32 %v2733, %v2719
    %v2738 = vadd.f32 %v2734, %v2715
    %v2739 = vadd.f32 %v2735, %v2719
    %v2740 = vmax.f32 %v2736, 0.0
    %v2741 = vmax.f32 %v2737, 0.0
    %v2742 = vmax.f32 %v2738, 0.0
    %v2743 = vmax.f32 %v2739, 0.0
    %v2744 = vpack.c.bf16 %v2742, %v2740
    %v2745 = vpack.c.bf16 %v2743, %v2741
    %v2747 = vsel %vm114, %v2730, 0
    %v2750 = vsel %vm114, %v2731, 0
    %2752 = vmatprep.subr.bf16.mxu0 0
    %2753 = vmatpush1.bf16.msra.mxu0 0
    %2754 = vmatprep.subr.bf16.mxu0 0
    %2755 = vmatpush1.bf16.msra.mxu0 0
    %2756 = vmatprep.subr.bf16.mxu0 0
    %2757 = vmatpush1.bf16.msra.mxu0 0
    %2758 = vmatprep.subr.bf16.mxu0 0
    %2759 = vmatpush1.bf16.msra.mxu0 0
    %2760 = vmatprep.subr.bf16.mxu0 0
    %2761 = vmatpush1.bf16.msra.mxu0 0
    %2762 = vmatprep.subr.bf16.mxu0 0
    %2763 = vmatpush1.bf16.msra.mxu0 0
    %2764 = vmatprep.subr.bf16.mxu0 0
    %2765 = vmatpush1.bf16.msra.mxu0 0
    %2766 = vmatprep.subr.bf16.mxu0 %v2750
    %2767 = vmatpush1.bf16.msra.mxu0 %v2747
    %2768 = vmatprep.subr.bf16.mxu0 0
    %2769 = vmatpush2.bf16.msra.mxu0 0
    %2770 = vmatprep.subr.bf16.mxu0 0
    %2771 = vmatpush2.bf16.msra.mxu0 0
    %2772 = vmatprep.subr.bf16.mxu0 0
    %2773 = vmatpush2.bf16.msra.mxu0 0
    %2774 = vmatprep.subr.bf16.mxu0 0
    %2775 = vmatpush2.bf16.msra.mxu0 0
    %2776 = vmatprep.subr.bf16.mxu0 0
    %2777 = vmatpush2.bf16.msra.mxu0 0
    %2778 = vmatprep.subr.bf16.mxu0 0
    %2779 = vmatpush2.bf16.msra.mxu0 0
    %2780 = vmatprep.subr.bf16.mxu0 0
    %2781 = vmatpush2.bf16.msra.mxu0 0
    %2782 = vmatprep.subr.bf16.mxu0 0
    %2783 = vmatpush2.bf16.msra.mxu0 0
    %2784 = vmatprep.mubr.bf16.mxu0 0
    %2785 = vmatmul.mubr.bf16.gmra.mxu0 %v112
    %v2786 = vpop.f32.mrf.mxu0
    %v2787 = vadd.f32 0.0, %v2786
    %v2788 = vpop.f32.mrf.mxu0
    %v2789 = vadd.f32 0.0, %v2788
    %v2790 = vpop.f32.mrf.mxu0
    %v2791 = vpop.f32.mrf.mxu0
    %2792 = vdwg.mxu0
    %v2793 = vpack.c.bf16 %v2787, %v2787
    %v2794 = vpack.c.bf16 %v2789, %v2789
    %v2797 = vrot.slane %v2730, 4
    %v2798 = vrot.slane %v2731, 4
    %v2801 = vrot.slane %v2793, 4
    %v2802 = vrot.slane %v2794, 4
    %v2805 = vsel %vm114, %v2797, %v2801
    %v2809 = vsel %vm114, %v2798, %v2802
    %v2811 = vld [vmem:[%s12] sm:$0xf]
    %v2812 = vld [vmem:[%s12 + $0x4] sm:$0xf]
    %v2813 = vld [vmem:[%s12 + $0x8] sm:$0xf]
    %v2814 = vld [vmem:[%s12 + $0xc] sm:$0xf]
    %v2815 = vld [vmem:[%s12 + $0x10] sm:$0xf]
    %v2816 = vld [vmem:[%s12 + $0x14] sm:$0xf]
    %v2817 = vld [vmem:[%s12 + $0x18] sm:$0xf]
    %v2818 = vld [vmem:[%s12 + $0x1c] sm:$0xf]
    %v2819 = vld [vmem:[%s12 + $0x20] sm:$0xf]
    %v2820 = vld [vmem:[%s12 + $0x24] sm:$0xf]
    %v2821 = vld [vmem:[%s12 + $0x28] sm:$0xf]
    %v2822 = vld [vmem:[%s12 + $0x2c] sm:$0xf]
    %v2823 = vld [vmem:[%s12 + $0x30] sm:$0xf]
    %v2824 = vld [vmem:[%s12 + $0x34] sm:$0xf]
    %v2825 = vld [vmem:[%s12 + $0x38] sm:$0xf]
    %v2826 = vld [vmem:[%s12 + $0x3c] sm:$0xf]
    %v2827 = vld [vmem:[%s12 + $0x40] sm:$0xf]
    %v2828 = vld [vmem:[%s12 + $0x44] sm:$0xf]
    %v2829 = vld [vmem:[%s12 + $0x48] sm:$0xf]
    %v2830 = vld [vmem:[%s12 + $0x4c] sm:$0xf]
    %v2831 = vld [vmem:[%s12 + $0x50] sm:$0xf]
    %v2832 = vld [vmem:[%s12 + $0x54] sm:$0xf]
    %v2833 = vld [vmem:[%s12 + $0x58] sm:$0xf]
    %v2834 = vld [vmem:[%s12 + $0x5c] sm:$0xf]
    %v2835 = vld [vmem:[%s12 + $0x60] sm:$0xf]
    %v2836 = vld [vmem:[%s12 + $0x64] sm:$0xf]
    %v2837 = vld [vmem:[%s12 + $0x68] sm:$0xf]
    %v2838 = vld [vmem:[%s12 + $0x6c] sm:$0xf]
    %v2839 = vld [vmem:[%s12 + $0x70] sm:$0xf]
    %v2840 = vld [vmem:[%s12 + $0x74] sm:$0xf]
    %v2841 = vld [vmem:[%s12 + $0x78] sm:$0xf]
    %v2842 = vld [vmem:[%s12 + $0x7c] sm:$0xf]
    %v2843 = vld [vmem:[%s12 + $0x80] sm:$0xf]
    %v2844 = vld [vmem:[%s12 + $0x84] sm:$0xf]
    %v2845 = vld [vmem:[%s12 + $0x88] sm:$0xf]
    %v2846 = vld [vmem:[%s12 + $0x8c] sm:$0xf]
    %v2847 = vld [vmem:[%s12 + $0x90] sm:$0xf]
    %v2848 = vld [vmem:[%s12 + $0x94] sm:$0xf]
    %v2849 = vld [vmem:[%s12 + $0x98] sm:$0xf]
    %v2850 = vld [vmem:[%s12 + $0x9c] sm:$0xf]
    %v2851 = vld [vmem:[%s12 + $0xa0] sm:$0xf]
    %v2852 = vld [vmem:[%s12 + $0xa4] sm:$0xf]
    %v2853 = vld [vmem:[%s12 + $0xa8] sm:$0xf]
    %v2854 = vld [vmem:[%s12 + $0xac] sm:$0xf]
    %v2855 = vld [vmem:[%s12 + $0xb0] sm:$0xf]
    %v2856 = vld [vmem:[%s12 + $0xb4] sm:$0xf]
    %v2857 = vld [vmem:[%s12 + $0xb8] sm:$0xf]
    %v2858 = vld [vmem:[%s12 + $0xbc] sm:$0xf]
    %v2859 = vld [vmem:[%s12 + $0xc0] sm:$0xf]
    %v2860 = vld [vmem:[%s12 + $0xc4] sm:$0xf]
    %v2861 = vld [vmem:[%s12 + $0xc8] sm:$0xf]
    %v2862 = vld [vmem:[%s12 + $0xcc] sm:$0xf]
    %v2863 = vld [vmem:[%s12 + $0xd0] sm:$0xf]
    %v2864 = vld [vmem:[%s12 + $0xd4] sm:$0xf]
    %v2865 = vld [vmem:[%s12 + $0xd8] sm:$0xf]
    %v2866 = vld [vmem:[%s12 + $0xdc] sm:$0xf]
    %v2867 = vld [vmem:[%s12 + $0xe0] sm:$0xf]
    %v2868 = vld [vmem:[%s12 + $0xe4] sm:$0xf]
    %v2869 = vld [vmem:[%s12 + $0xe8] sm:$0xf]
    %v2870 = vld [vmem:[%s12 + $0xec] sm:$0xf]
    %v2871 = vld [vmem:[%s12 + $0xf0] sm:$0xf]
    %v2872 = vld [vmem:[%s12 + $0xf4] sm:$0xf]
    %v2873 = vld [vmem:[%s12 + $0xf8] sm:$0xf]
    %v2874 = vld [vmem:[%s12 + $0xfc] sm:$0xf]
    %v2875 = vld [vmem:[%s13] sm:$0x1]
    %v2877 = vlaneseq
    %v2878 = vshrl.u32 %v2877, 7
    %v2879 = vsub.s32 0, %v2878
    %v2880 = vrot.slane %v2875, %v2879
    %v2946 = vunpack.c.l.b16 %v2811
    %v2947 = vunpack.c.l.b16 %v2812
    %v2948 = vunpack.c.l.b16 %v2813
    %v2949 = vunpack.c.l.b16 %v2814
    %v2950 = vunpack.c.l.b16 %v2815
    %v2951 = vunpack.c.l.b16 %v2816
    %v2952 = vunpack.c.l.b16 %v2817
    %v2953 = vunpack.c.l.b16 %v2818
    %v2954 = vunpack.c.l.b16 %v2819
    %v2955 = vunpack.c.l.b16 %v2820
    %v2956 = vunpack.c.l.b16 %v2821
    %v2957 = vunpack.c.l.b16 %v2822
    %v2958 = vunpack.c.l.b16 %v2823
    %v2959 = vunpack.c.l.b16 %v2824
    %v2960 = vunpack.c.l.b16 %v2825
    %v2961 = vunpack.c.l.b16 %v2826
    %v2962 = vunpack.c.l.b16 %v2827
    %v2963 = vunpack.c.l.b16 %v2828
    %v2964 = vunpack.c.l.b16 %v2829
    %v2965 = vunpack.c.l.b16 %v2830
    %v2966 = vunpack.c.l.b16 %v2831
    %v2967 = vunpack.c.l.b16 %v2832
    %v2968 = vunpack.c.l.b16 %v2833
    %v2969 = vunpack.c.l.b16 %v2834
    %v2970 = vunpack.c.l.b16 %v2835
    %v2971 = vunpack.c.l.b16 %v2836
    %v2972 = vunpack.c.l.b16 %v2837
    %v2973 = vunpack.c.l.b16 %v2838
    %v2974 = vunpack.c.l.b16 %v2839
    %v2975 = vunpack.c.l.b16 %v2840
    %v2976 = vunpack.c.l.b16 %v2841
    %v2977 = vunpack.c.l.b16 %v2842
    %v2978 = vunpack.c.l.b16 %v2843
    %v2979 = vunpack.c.l.b16 %v2844
    %v2980 = vunpack.c.l.b16 %v2845
    %v2981 = vunpack.c.l.b16 %v2846
    %v2982 = vunpack.c.l.b16 %v2847
    %v2983 = vunpack.c.l.b16 %v2848
    %v2984 = vunpack.c.l.b16 %v2849
    %v2985 = vunpack.c.l.b16 %v2850
    %v2986 = vunpack.c.l.b16 %v2851
    %v2987 = vunpack.c.l.b16 %v2852
    %v2988 = vunpack.c.l.b16 %v2853
    %v2989 = vunpack.c.l.b16 %v2854
    %v2990 = vunpack.c.l.b16 %v2855
    %v2991 = vunpack.c.l.b16 %v2856
    %v2992 = vunpack.c.l.b16 %v2857
    %v2993 = vunpack.c.l.b16 %v2858
    %v2994 = vunpack.c.l.b16 %v2859
    %v2995 = vunpack.c.l.b16 %v2860
    %v2996 = vunpack.c.l.b16 %v2861
    %v2997 = vunpack.c.l.b16 %v2862
    %v2998 = vunpack.c.l.b16 %v2863
    %v2999 = vunpack.c.l.b16 %v2864
    %v3000 = vunpack.c.l.b16 %v2865
    %v3001 = vunpack.c.l.b16 %v2866
    %v3002 = vunpack.c.l.b16 %v2867
    %v3003 = vunpack.c.l.b16 %v2868
    %v3004 = vunpack.c.l.b16 %v2869
    %v3005 = vunpack.c.l.b16 %v2870
    %v3006 = vunpack.c.l.b16 %v2871
    %v3007 = vunpack.c.l.b16 %v2872
    %v3008 = vunpack.c.l.b16 %v2873
    %v3009 = vunpack.c.l.b16 %v2874
    %v3010 = vpack.c.b16 %v2947, %v2946
    %v3011 = vpack.c.b16 %v2949, %v2948
    %v3012 = vpack.c.b16 %v2951, %v2950
    %v3013 = vpack.c.b16 %v2953, %v2952
    %v3014 = vpack.c.b16 %v2955, %v2954
    %v3015 = vpack.c.b16 %v2957, %v2956
    %v3016 = vpack.c.b16 %v2959, %v2958
    %v3017 = vpack.c.b16 %v2961, %v2960
    %v3018 = vpack.c.b16 %v2963, %v2962
    %v3019 = vpack.c.b16 %v2965, %v2964
    %v3020 = vpack.c.b16 %v2967, %v2966
    %v3021 = vpack.c.b16 %v2969, %v2968
    %v3022 = vpack.c.b16 %v2971, %v2970
    %v3023 = vpack.c.b16 %v2973, %v2972
    %v3024 = vpack.c.b16 %v2975, %v2974
    %v3025 = vpack.c.b16 %v2977, %v2976
    %v3026 = vpack.c.b16 %v2979, %v2978
    %v3027 = vpack.c.b16 %v2981, %v2980
    %v3028 = vpack.c.b16 %v2983, %v2982
    %v3029 = vpack.c.b16 %v2985, %v2984
    %v3030 = vpack.c.b16 %v2987, %v2986
    %v3031 = vpack.c.b16 %v2989, %v2988
    %v3032 = vpack.c.b16 %v2991, %v2990
    %v3033 = vpack.c.b16 %v2993, %v2992
    %v3034 = vpack.c.b16 %v2995, %v2994
    %v3035 = vpack.c.b16 %v2997, %v2996
    %v3036 = vpack.c.b16 %v2999, %v2998
    %v3037 = vpack.c.b16 %v3001, %v3000
    %v3038 = vpack.c.b16 %v3003, %v3002
    %v3039 = vpack.c.b16 %v3005, %v3004
    %v3040 = vpack.c.b16 %v3007, %v3006
    %v3041 = vpack.c.b16 %v3009, %v3008
    %3074 = vmatprep.subr.bf16.mxu0 0
    %3075 = vmatpush1.bf16.msra.mxu0 %v3017
    %3076 = vmatprep.subr.bf16.mxu0 0
    %3077 = vmatpush1.bf16.msra.mxu0 %v3016
    %3078 = vmatprep.subr.bf16.mxu0 0
    %3079 = vmatpush1.bf16.msra.mxu0 %v3015
    %3080 = vmatprep.subr.bf16.mxu0 0
    %3081 = vmatpush1.bf16.msra.mxu0 %v3014
    %3082 = vmatprep.subr.bf16.mxu0 0
    %3083 = vmatpush1.bf16.msra.mxu0 %v3013
    %3084 = vmatprep.subr.bf16.mxu0 0
    %3085 = vmatpush1.bf16.msra.mxu0 %v3012
    %3086 = vmatprep.subr.bf16.mxu0 0
    %3087 = vmatpush1.bf16.msra.mxu0 %v3011
    %3088 = vmatprep.subr.bf16.mxu0 0
    %3089 = vmatpush1.bf16.msra.mxu0 %v3010
    %3090 = vmatprep.subr.bf16.mxu0 0
    %3091 = vmatpush2.bf16.msra.mxu0 %v3025
    %3092 = vmatprep.subr.bf16.mxu0 0
    %3093 = vmatpush2.bf16.msra.mxu0 %v3024
    %3094 = vmatprep.subr.bf16.mxu0 0
    %3095 = vmatpush2.bf16.msra.mxu0 %v3023
    %3096 = vmatprep.subr.bf16.mxu0 0
    %3097 = vmatpush2.bf16.msra.mxu0 %v3022
    %3098 = vmatprep.subr.bf16.mxu0 0
    %3099 = vmatpush2.bf16.msra.mxu0 %v3021
    %3100 = vmatprep.subr.bf16.mxu0 0
    %3101 = vmatpush2.bf16.msra.mxu0 %v3020
    %3102 = vmatprep.subr.bf16.mxu0 0
    %3103 = vmatpush2.bf16.msra.mxu0 %v3019
    %3104 = vmatprep.subr.bf16.mxu0 0
    %3105 = vmatpush2.bf16.msra.mxu0 %v3018
    %3106 = vmatprep.mubr.bf16.mxu0 %v2731
    %3107 = vmatmul.mubr.bf16.gmra.mxu0 %v2730
    %v3108 = vpop.f32.mrf.mxu0
    %v3109 = vadd.f32 %v2880, %v3108
    %v3110 = vpop.f32.mrf.mxu0
    %v3111 = vpop.f32.mrf.mxu0
    %v3112 = vadd.f32 %v2880, %v3111
    %v3113 = vpop.f32.mrf.mxu0
    %3114 = vmatprep.mubr.bf16.mxu0 %v2745
    %3115 = vmatmul.mubr.bf16.gmra.mxu0 %v2744
    %v3116 = vpop.f32.mrf.mxu0
    %v3117 = vadd.f32 %v2880, %v3116
    %v3118 = vpop.f32.mrf.mxu0
    %v3119 = vpop.f32.mrf.mxu0
    %v3120 = vadd.f32 %v2880, %v3119
    %v3121 = vpop.f32.mrf.mxu0
    %3122 = vdwg.mxu0
    %3123 = vmatprep.subr.bf16.mxu0 0
    %3124 = vmatpush1.bf16.msra.mxu0 %v3033
    %3125 = vmatprep.subr.bf16.mxu0 0
    %3126 = vmatpush1.bf16.msra.mxu0 %v3032
    %3127 = vmatprep.subr.bf16.mxu0 0
    %3128 = vmatpush1.bf16.msra.mxu0 %v3031
    %3129 = vmatprep.subr.bf16.mxu0 0
    %3130 = vmatpush1.bf16.msra.mxu0 %v3030
    %3131 = vmatprep.subr.bf16.mxu0 0
    %3132 = vmatpush1.bf16.msra.mxu0 %v3029
    %3133 = vmatprep.subr.bf16.mxu0 0
    %3134 = vmatpush1.bf16.msra.mxu0 %v3028
    %3135 = vmatprep.subr.bf16.mxu0 0
    %3136 = vmatpush1.bf16.msra.mxu0 %v3027
    %3137 = vmatprep.subr.bf16.mxu0 0
    %3138 = vmatpush1.bf16.msra.mxu0 %v3026
    %3139 = vmatprep.subr.bf16.mxu0 0
    %3140 = vmatpush2.bf16.msra.mxu0 %v3041
    %3141 = vmatprep.subr.bf16.mxu0 0
    %3142 = vmatpush2.bf16.msra.mxu0 %v3040
    %3143 = vmatprep.subr.bf16.mxu0 0
    %3144 = vmatpush2.bf16.msra.mxu0 %v3039
    %3145 = vmatprep.subr.bf16.mxu0 0
    %3146 = vmatpush2.bf16.msra.mxu0 %v3038
    %3147 = vmatprep.subr.bf16.mxu0 0
    %3148 = vmatpush2.bf16.msra.mxu0 %v3037
    %3149 = vmatprep.subr.bf16.mxu0 0
    %3150 = vmatpush2.bf16.msra.mxu0 %v3036
    %3151 = vmatprep.subr.bf16.mxu0 0
    %3152 = vmatpush2.bf16.msra.mxu0 %v3035
    %3153 = vmatprep.subr.bf16.mxu0 0
    %3154 = vmatpush2.bf16.msra.mxu0 %v3034
    %3155 = vmatprep.mubr.bf16.mxu0 %v2745
    %3156 = vmatmul.mubr.bf16.gmra.mxu0 %v2744
    %v3157 = vpop.f32.mrf.mxu0
    %v3158 = vadd.f32 %v3109, %v3157
    %v3159 = vpop.f32.mrf.mxu0
    %v3160 = vpop.f32.mrf.mxu0
    %v3161 = vadd.f32 %v3112, %v3160
    %v3162 = vpop.f32.mrf.mxu0
    %3163 = vmatprep.mubr.bf16.mxu0 %v2809
    %3164 = vmatmul.mubr.bf16.gmra.mxu0 %v2805
    %v3165 = vpop.f32.mrf.mxu0
    %v3166 = vadd.f32 %v3117, %v3165
    %v3167 = vpop.f32.mrf.mxu0
    %v3168 = vpop.f32.mrf.mxu0
    %v3169 = vadd.f32 %v3120, %v3168
    %v3170 = vpop.f32.mrf.mxu0
    %3171 = vdwg.mxu0
    %v3172 = vxor.u32 %v3158, 2147483648
    %v3173 = vxor.u32 %v3161, 2147483648
    %v3174 = vxor.u32 %v3166, 2147483648
    %v3175 = vxor.u32 %v3169, 2147483648
    %v3176 = vmul.f32 %v3172, 1.442695
    %v3177 = vpow.pop %v3176
    %v3178 = vmul.f32 %v3173, 1.442695
    %v3179 = vpow.pop %v3178
    %v3180 = vmul.f32 %v3174, 1.442695
    %v3181 = vpow.pop %v3180
    %v3182 = vmul.f32 %v3175, 1.442695
    %v3183 = vpow.pop %v3182
    %v3184 = vadd.f32 %v3177, 1.0
    %v3185 = vadd.f32 %v3179, 1.0
    %v3186 = vadd.f32 %v3181, 1.0
    %v3187 = vadd.f32 %v3183, 1.0
    %v3188 = vrcp.pop %v3184
    %v3189 = vmul.f32 1.0, %v3188
    %v3190 = vrcp.pop %v3185
    %v3191 = vmul.f32 1.0, %v3190
    %v3192 = vrcp.pop %v3186
    %v3193 = vmul.f32 1.0, %v3192
    %v3194 = vrcp.pop %v3187
    %v3195 = vmul.f32 1.0, %v3194
    %vm3196 = vcmask 523264
    %3197 = vst.msk [vmem:[%s14] sm:$0xff] %vm3196, %v3189
    %3198 = vst.msk [vmem:[%s14 + $0x8] sm:$0xff] %vm3196, %v3191
    %3199 = vst.msk [vmem:[%s14 + $0x10] sm:$0xff] %vm3196, %v3193
    %3200 = vst.msk [vmem:[%s14 + $0x18] sm:$0xff] %vm3196, %v3195
    // Predicated region
    $region74: #{decoder_forward.1} parent=1 // pred_check
      _
    $region75: #{decoder_forward.1} parent=1 // pred_check_branch
      %3202 = sbr.rel (0) target = $region77
    $region76: #{decoder_forward.1} parent=1 // pred_region
      _
    $region77: #{decoder_forward.1} parent=1 // pred_fallthru
      _
    // Predicated region
    $region78: #{decoder_forward.1} parent=1 // pred_check
      _
    $region79: #{decoder_forward.1} parent=1 // pred_check_branch
      %3204 = sbr.rel (0) target = $region81
    $region80: #{decoder_forward.1} parent=1 // pred_region
      _
    $region81: #{decoder_forward.1} parent=1 // pred_fallthru
      _
    %3205 = vsyncpa [#allocation3], 1
    %3206 = vsyncpa [#allocation5], 1
    %3207 = vsyncpa [#allocation8], 1

</llo_original>
